<compile_context>
chip_gen: v5e
topology: v5e:2x2
jax: 0.10.0
libtpu: 0.0.40
codegen_flags: <defaults>
</compile_context>

<pallas_src>
import functools

import jax
import jax.numpy as jnp
from jax import lax
from jax.experimental import pallas as pl
from jax.experimental.pallas import tpu as pltpu


NSUB = 4          # 2x2 max-pool sub-positions
KPATCH = 9        # 3x3 conv taps
NPOOL = 196       # 14*14 pooled spatial positions per image
GROUP = 256       # NPOOL padded up so each pool-group slice is lane-aligned (x128)
NCH = 16          # conv output channels
NCLS = 2          # fc outputs
OUT_PAD = 8       # sublane pad of the per-image logits row -> legal (8, 2) out blocks


def _fused_cnn_kernel(p_ref, wc_ref, bc_ref, wf_ref, bf_ref, o_ref):
    """conv(3x3, pad 1) + ReLU + maxpool(2x2) + fc for one tile of images.

    p_ref : (TB, 9, 4*256)  im2col patches, lane-dense; column = s*256 + (h*14 + w)
    wc_ref: (16, 9)         conv weight
    bc_ref: (16, 1)         conv bias
    wf_ref: (2, 16, 256)    fc weight in (out, channel, pooled-spatial) order, zero-padded
    bf_ref: (1, 2)          fc bias
    o_ref : (TB, 8, 2)      logits (each image's row broadcast over the pad axis of 8)
    """
    wc = wc_ref[...]
    bc = bc_ref[...]
    wf0 = wf_ref[0]
    wf1 = wf_ref[1]
    bf = bf_ref[...]
    tb = p_ref.shape[0]
    for i in range(tb):
        # One MXU matmul per image covers all four pool sub-positions: (16,9) @ (9,1024).
        conv = jnp.dot(wc, p_ref[i], preferred_element_type=jnp.float32)   # (16, 1024)
        # 2x2 max-pool == elementwise max over the four lane-aligned column groups (VPU).
        m = jnp.maximum(
            jnp.maximum(conv[:, 0 * GROUP:1 * GROUP], conv[:, 1 * GROUP:2 * GROUP]),
            jnp.maximum(conv[:, 2 * GROUP:3 * GROUP], conv[:, 3 * GROUP:4 * GROUP]),
        )
        # Bias-add and ReLU commute with the max (monotone) -> matches relu-then-pool.
        pooled = jnp.maximum(m + bc, 0.0)                                   # (16, 256)
        # Fused fully-connected layer: VPU multiply + full reduce per class.
        # (Padded columns >= 196 are zero in wf, so they contribute nothing.)
        l0 = jnp.sum(pooled * wf0, keepdims=True)                           # (1, 1)
        l1 = jnp.sum(pooled * wf1, keepdims=True)                           # (1, 1)
        row = jnp.concatenate([l0, l1], axis=1) + bf                        # (1, 2)
        o_ref[i] = jnp.broadcast_to(row, (OUT_PAD, NCLS))


def simple_cnn_forward(x, w_conv, b_conv, w_fc, b_fc, *, images_per_step=8,
                       compute_dtype=jnp.float32):
    """x: (B, 1, 28, 28) float32 (NCHW). Returns (B, 2) logits, matching SimpleCNN."""
    B = x.shape[0]
    tb = images_per_step
    b_pad = ((B + tb - 1) // tb) * tb

    # --- glue: im2col grouped by the 4 sub-positions of each 2x2 pool window ---
    # TODO(synk): build the 9 shifted views inside the kernel from the padded (B,30,30)
    # image (needs stride-2 lane gathers) to avoid the ~9x patch expansion in HBM.
    img = x[:, 0]                                               # (B, 28, 28)
    padded = jnp.pad(img, ((0, 0), (1, 1), (1, 1)))             # (B, 30, 30)
    patches = jnp.stack(
        [padded[:, di:di + 28, dj:dj + 28] for di in range(3) for dj in range(3)],
        axis=1,
    )                                                           # (B, 9, 28, 28)
    subs = []
    for pa in (0, 1):
        for pb in (0, 1):
            sub = patches[:, :, pa::2, pb::2].reshape(B, KPATCH, NPOOL)   # (B, 9, 196)
            subs.append(jnp.pad(sub, ((0, 0), (0, 0), (0, GROUP - NPOOL))))
    P = jnp.concatenate(subs, axis=2)                           # (B, 9, 1024)
    P = jnp.pad(P, ((0, b_pad - B), (0, 0), (0, 0))).astype(compute_dtype)

    wc = w_conv.reshape(NCH, KPATCH).astype(compute_dtype)      # (16, 9)
    bc = b_conv.reshape(NCH, 1).astype(jnp.float32)             # (16, 1)
    # fc weight in (out, channel, pooled-spatial) order == PyTorch's NCHW flatten order;
    # this reshape/pad is a one-time glue op, so no runtime activation transpose.
    wf = jnp.pad(w_fc.reshape(NCLS, NCH, NPOOL).astype(jnp.float32),
                 ((0, 0), (0, 0), (0, GROUP - NPOOL)))          # (2, 16, 256)
    bf = b_fc.reshape(1, NCLS).astype(jnp.float32)              # (1, 2)

    out = pl.pallas_call(
        _fused_cnn_kernel,
        out_shape=jax.ShapeDtypeStruct((b_pad, OUT_PAD, NCLS), jnp.float32),
        grid=(b_pad // tb,),
        in_specs=[
            pl.BlockSpec((tb, KPATCH, NSUB * GROUP), lambda b: (b, 0, 0)),
            pl.BlockSpec((NCH, KPATCH), lambda b: (0, 0)),
            pl.BlockSpec((NCH, 1), lambda b: (0, 0)),
            pl.BlockSpec((NCLS, NCH, GROUP), lambda b: (0, 0, 0)),
            pl.BlockSpec((1, NCLS), lambda b: (0, 0)),
        ],
        out_specs=pl.BlockSpec((tb, OUT_PAD, NCLS), lambda b: (b, 0, 0)),
        compiler_params=pltpu.CompilerParams(
            dimension_semantics=("parallel",),
            vmem_limit_bytes=32 * 1024 * 1024,
        ),
    )(P, wc, bc, wf, bf)
    return out[:B, 0, :]


def reference_forward(x, w_conv, b_conv, w_fc, b_fc):
    """Pure-JAX reference matching the PyTorch module exactly."""
    y = lax.conv_general_dilated(
        x, w_conv, window_strides=(1, 1), padding=[(1, 1), (1, 1)],
        dimension_numbers=("NCHW", "OIHW", "NCHW"),
    )
    y = y + b_conv[None, :, None, None]
    y = jnp.maximum(y, 0.0)
    y = lax.reduce_window(y, -jnp.inf, lax.max, (1, 1, 2, 2), (1, 1, 2, 2), "VALID")
    y = y.reshape(x.shape[0], -1)
    return y @ w_fc.T + b_fc


if __name__ == "__main__":
    key = jax.random.PRNGKey(0)
    k1, k2, k3, k4, k5 = jax.random.split(key, 5)

    # Deterministic synthetic parameters (shapes from SimpleCNN.__init__).
    w_conv = jax.random.normal(k1, (16, 1, 3, 3), dtype=jnp.float32) * 0.1
    b_conv = jax.random.normal(k2, (16,), dtype=jnp.float32) * 0.1
    w_fc = jax.random.normal(k3, (2, 16 * 14 * 14), dtype=jnp.float32) * 0.02
    b_fc = jax.random.normal(k4, (2,), dtype=jnp.float32) * 0.1

    # Input: fc1 expects 16*14*14, so the conv input is (B, 1, 28, 28).
    x = jax.random.normal(k5, (2, 1, 28, 28), dtype=jnp.float32)

    ref = jax.block_until_ready(reference_forward(x, w_conv, b_conv, w_fc, b_fc))

    # float32 path (default): tight check.
    fwd_f32 = jax.jit(functools.partial(simple_cnn_forward, compute_dtype=jnp.float32))
    out = jax.block_until_ready(fwd_f32(x, w_conv, b_conv, w_fc, b_fc))
    assert out.shape == (2, 2), out.shape
    assert jnp.allclose(out, ref, rtol=1e-4, atol=1e-4), (out, ref)

    # bfloat16 patches/conv-weight (halves DMA bytes on v6e/v7x): looser check.
    fwd_bf16 = jax.jit(functools.partial(simple_cnn_forward, compute_dtype=jnp.bfloat16))
    out_bf16 = jax.block_until_ready(fwd_bf16(x, w_conv, b_conv, w_fc, b_fc))
    assert out_bf16.shape == (2, 2), out_bf16.shape
    assert jnp.allclose(out_bf16, ref, rtol=1e-1, atol=1e-1), (out_bf16, ref)

    print("KERNEL_OK")
</pallas_src>

<mosaic_0001>
module attributes {stable_mosaic.version = 11 : i64} {
  func.func @_fused_cnn_kernel(%arg0: i32, %arg1: memref<8x9x1024xf32, #tpu.memory_space<vmem>>, %arg2: memref<16x9xf32, #tpu.memory_space<vmem>>, %arg3: memref<16x1xf32, #tpu.memory_space<vmem>>, %arg4: memref<2x16x256xf32, #tpu.memory_space<vmem>>, %arg5: memref<1x2xf32, #tpu.memory_space<vmem>>, %arg6: memref<8x8x2xf32, #tpu.memory_space<vmem>>) attributes {dimension_semantics = [#tpu.dimension_semantics<parallel>], iteration_bounds = array<i64: 1>, scalar_prefetch = 0 : i64, scratch_operands = 0 : i64, tpu.core_type = #tpu.core_type<tc>, window_params = [{transform_indices = @transform_0, window_bounds = array<i64: 8, 9, 1024>}, {pipeline_mode = #tpu.pipeline_mode<synchronous>, transform_indices = @transform_1, window_bounds = array<i64: 16, 9>}, {pipeline_mode = #tpu.pipeline_mode<synchronous>, transform_indices = @transform_2, window_bounds = array<i64: 16, 1>}, {pipeline_mode = #tpu.pipeline_mode<synchronous>, transform_indices = @transform_3, window_bounds = array<i64: 2, 16, 256>}, {pipeline_mode = #tpu.pipeline_mode<synchronous>, transform_indices = @transform_4, window_bounds = array<i64: 1, 2>}, {transform_indices = @transform_5, window_bounds = array<i64: 8, 8, 2>}]} {
    %c0 = arith.constant 0 : index
    %c0_0 = arith.constant 0 : index
    %0 = vector.load %arg2[%c0, %c0_0] : memref<16x9xf32, #tpu.memory_space<vmem>>, vector<16x9xf32>
    %c0_1 = arith.constant 0 : index
    %c0_2 = arith.constant 0 : index
    %1 = vector.load %arg3[%c0_1, %c0_2] : memref<16x1xf32, #tpu.memory_space<vmem>>, vector<16x1xf32>
    %c0_3 = arith.constant 0 : index
    %c0_4 = arith.constant 0 : index
    %c0_5 = arith.constant 0 : index
    %2 = vector.load %arg4[%c0_3, %c0_4, %c0_5] : memref<2x16x256xf32, #tpu.memory_space<vmem>>, vector<1x16x256xf32>
    %3 = vector.shape_cast %2 : vector<1x16x256xf32> to vector<16x256xf32>
    %c1 = arith.constant 1 : index
    %c0_6 = arith.constant 0 : index
    %c0_7 = arith.constant 0 : index
    %4 = vector.load %arg4[%c1, %c0_6, %c0_7] : memref<2x16x256xf32, #tpu.memory_space<vmem>>, vector<1x16x256xf32>
    %5 = vector.shape_cast %4 : vector<1x16x256xf32> to vector<16x256xf32>
    %c0_8 = arith.constant 0 : index
    %c0_9 = arith.constant 0 : index
    %6 = vector.load %arg5[%c0_8, %c0_9] : memref<1x2xf32, #tpu.memory_space<vmem>>, vector<1x2xf32>
    %c0_10 = arith.constant 0 : index
    %c0_11 = arith.constant 0 : index
    %c0_12 = arith.constant 0 : index
    %7 = vector.load %arg1[%c0_10, %c0_11, %c0_12] : memref<8x9x1024xf32, #tpu.memory_space<vmem>>, vector<1x9x1024xf32>
    %8 = vector.shape_cast %7 : vector<1x9x1024xf32> to vector<9x1024xf32>
    %cst = arith.constant dense<0.000000e+00> : vector<16x1024xf32>
    %9 = tpu.matmul %0, %8, %cst {dimension_numbers = #tpu.dot_dimension_numbers<[1], [0], [0], [1], [0, 0, 1, 1], [], []>} : vector<16x9xf32>, vector<9x1024xf32>, vector<16x1024xf32> -> vector<16x1024xf32>
    %10 = vector.extract_strided_slice %9 {offsets = [0, 0], sizes = [16, 256], strides = [1, 1]} : vector<16x1024xf32> to vector<16x256xf32>
    %11 = vector.extract_strided_slice %9 {offsets = [0, 256], sizes = [16, 256], strides = [1, 1]} : vector<16x1024xf32> to vector<16x256xf32>
    %12 = arith.maximumf %10, %11 : vector<16x256xf32>
    %13 = vector.extract_strided_slice %9 {offsets = [0, 512], sizes = [16, 256], strides = [1, 1]} : vector<16x1024xf32> to vector<16x256xf32>
    %14 = vector.extract_strided_slice %9 {offsets = [0, 768], sizes = [16, 256], strides = [1, 1]} : vector<16x1024xf32> to vector<16x256xf32>
    %15 = arith.maximumf %13, %14 : vector<16x256xf32>
    %16 = arith.maximumf %12, %15 : vector<16x256xf32>
    %17 = vector.broadcast %1 : vector<16x1xf32> to vector<16x256xf32>
    %18 = arith.addf %16, %17 : vector<16x256xf32>
    %cst_13 = arith.constant 0.000000e+00 : f32
    %19 = vector.broadcast %cst_13 : f32 to vector<16x256xf32>
    %20 = arith.maximumf %18, %19 : vector<16x256xf32>
    %21 = arith.mulf %20, %3 : vector<16x256xf32>
    %22 = vector.shape_cast %21 : vector<16x256xf32> to vector<1x16x256xf32>
    %cst_14 = arith.constant dense<0.000000e+00> : vector<1xf32>
    %23 = vector.multi_reduction <add>, %22, %cst_14 [1, 2] : vector<1x16x256xf32> to vector<1xf32>
    %24 = vector.shape_cast %23 : vector<1xf32> to vector<1x1x1xf32>
    %25 = vector.extract %24[0, 0, 0] : f32 from vector<1x1x1xf32>
    %26 = vector.broadcast %25 : f32 to vector<1x1xf32>
    %27 = arith.mulf %20, %5 : vector<16x256xf32>
    %28 = vector.shape_cast %27 : vector<16x256xf32> to vector<1x16x256xf32>
    %cst_15 = arith.constant dense<0.000000e+00> : vector<1xf32>
    %29 = vector.multi_reduction <add>, %28, %cst_15 [1, 2] : vector<1x16x256xf32> to vector<1xf32>
    %30 = vector.shape_cast %29 : vector<1xf32> to vector<1x1x1xf32>
    %31 = vector.extract %30[0, 0, 0] : f32 from vector<1x1x1xf32>
    %32 = vector.broadcast %31 : f32 to vector<1x1xf32>
    %33 = tpu.concatenate %26, %32 in 1 : vector<1x1xf32>, vector<1x1xf32> -> vector<1x2xf32>
    %34 = arith.addf %33, %6 : vector<1x2xf32>
    %35 = vector.shape_cast %34 : vector<1x2xf32> to vector<1x2xf32>
    %36 = vector.broadcast %35 : vector<1x2xf32> to vector<8x2xf32>
    %c0_16 = arith.constant 0 : index
    %c0_17 = arith.constant 0 : index
    %c0_18 = arith.constant 0 : index
    %37 = vector.load %arg6[%c0_16, %c0_17, %c0_18] : memref<8x8x2xf32, #tpu.memory_space<vmem>>, vector<1x8x2xf32>
    %38 = vector.shape_cast %37 : vector<1x8x2xf32> to vector<8x2xf32>
    %39 = vector.shape_cast %36 : vector<8x2xf32> to vector<1x8x2xf32>
    tpu.vector_store %arg6[%c0_16, %c0_17, %c0_18], %39 {strides = array<i32>} : memref<8x8x2xf32, #tpu.memory_space<vmem>>, vector<1x8x2xf32>,
    %c1_19 = arith.constant 1 : index
    %c0_20 = arith.constant 0 : index
    %c0_21 = arith.constant 0 : index
    %40 = vector.load %arg1[%c1_19, %c0_20, %c0_21] : memref<8x9x1024xf32, #tpu.memory_space<vmem>>, vector<1x9x1024xf32>
    %41 = vector.shape_cast %40 : vector<1x9x1024xf32> to vector<9x1024xf32>
    %cst_22 = arith.constant dense<0.000000e+00> : vector<16x1024xf32>
    %42 = tpu.matmul %0, %41, %cst_22 {dimension_numbers = #tpu.dot_dimension_numbers<[1], [0], [0], [1], [0, 0, 1, 1], [], []>} : vector<16x9xf32>, vector<9x1024xf32>, vector<16x1024xf32> -> vector<16x1024xf32>
    %43 = vector.extract_strided_slice %42 {offsets = [0, 0], sizes = [16, 256], strides = [1, 1]} : vector<16x1024xf32> to vector<16x256xf32>
    %44 = vector.extract_strided_slice %42 {offsets = [0, 256], sizes = [16, 256], strides = [1, 1]} : vector<16x1024xf32> to vector<16x256xf32>
    %45 = arith.maximumf %43, %44 : vector<16x256xf32>
    %46 = vector.extract_strided_slice %42 {offsets = [0, 512], sizes = [16, 256], strides = [1, 1]} : vector<16x1024xf32> to vector<16x256xf32>
    %47 = vector.extract_strided_slice %42 {offsets = [0, 768], sizes = [16, 256], strides = [1, 1]} : vector<16x1024xf32> to vector<16x256xf32>
    %48 = arith.maximumf %46, %47 : vector<16x256xf32>
    %49 = arith.maximumf %45, %48 : vector<16x256xf32>
    %50 = vector.broadcast %1 : vector<16x1xf32> to vector<16x256xf32>
    %51 = arith.addf %49, %50 : vector<16x256xf32>
    %cst_23 = arith.constant 0.000000e+00 : f32
    %52 = vector.broadcast %cst_23 : f32 to vector<16x256xf32>
    %53 = arith.maximumf %51, %52 : vector<16x256xf32>
    %54 = arith.mulf %53, %3 : vector<16x256xf32>
    %55 = vector.shape_cast %54 : vector<16x256xf32> to vector<1x16x256xf32>
    %cst_24 = arith.constant dense<0.000000e+00> : vector<1xf32>
    %56 = vector.multi_reduction <add>, %55, %cst_24 [1, 2] : vector<1x16x256xf32> to vector<1xf32>
    %57 = vector.shape_cast %56 : vector<1xf32> to vector<1x1x1xf32>
    %58 = vector.extract %57[0, 0, 0] : f32 from vector<1x1x1xf32>
    %59 = vector.broadcast %58 : f32 to vector<1x1xf32>
    %60 = arith.mulf %53, %5 : vector<16x256xf32>
    %61 = vector.shape_cast %60 : vector<16x256xf32> to vector<1x16x256xf32>
    %cst_25 = arith.constant dense<0.000000e+00> : vector<1xf32>
    %62 = vector.multi_reduction <add>, %61, %cst_25 [1, 2] : vector<1x16x256xf32> to vector<1xf32>
    %63 = vector.shape_cast %62 : vector<1xf32> to vector<1x1x1xf32>
    %64 = vector.extract %63[0, 0, 0] : f32 from vector<1x1x1xf32>
    %65 = vector.broadcast %64 : f32 to vector<1x1xf32>
    %66 = tpu.concatenate %59, %65 in 1 : vector<1x1xf32>, vector<1x1xf32> -> vector<1x2xf32>
    %67 = arith.addf %66, %6 : vector<1x2xf32>
    %68 = vector.shape_cast %67 : vector<1x2xf32> to vector<1x2xf32>
    %69 = vector.broadcast %68 : vector<1x2xf32> to vector<8x2xf32>
    %c1_26 = arith.constant 1 : index
    %c0_27 = arith.constant 0 : index
    %c0_28 = arith.constant 0 : index
    %70 = vector.load %arg6[%c1_26, %c0_27, %c0_28] : memref<8x8x2xf32, #tpu.memory_space<vmem>>, vector<1x8x2xf32>
    %71 = vector.shape_cast %70 : vector<1x8x2xf32> to vector<8x2xf32>
    %72 = vector.shape_cast %69 : vector<8x2xf32> to vector<1x8x2xf32>
    tpu.vector_store %arg6[%c1_26, %c0_27, %c0_28], %72 {strides = array<i32>} : memref<8x8x2xf32, #tpu.memory_space<vmem>>, vector<1x8x2xf32>,
    %c2 = arith.constant 2 : index
    %c0_29 = arith.constant 0 : index
    %c0_30 = arith.constant 0 : index
    %73 = vector.load %arg1[%c2, %c0_29, %c0_30] : memref<8x9x1024xf32, #tpu.memory_space<vmem>>, vector<1x9x1024xf32>
    %74 = vector.shape_cast %73 : vector<1x9x1024xf32> to vector<9x1024xf32>
    %cst_31 = arith.constant dense<0.000000e+00> : vector<16x1024xf32>
    %75 = tpu.matmul %0, %74, %cst_31 {dimension_numbers = #tpu.dot_dimension_numbers<[1], [0], [0], [1], [0, 0, 1, 1], [], []>} : vector<16x9xf32>, vector<9x1024xf32>, vector<16x1024xf32> -> vector<16x1024xf32>
    %76 = vector.extract_strided_slice %75 {offsets = [0, 0], sizes = [16, 256], strides = [1, 1]} : vector<16x1024xf32> to vector<16x256xf32>
    %77 = vector.extract_strided_slice %75 {offsets = [0, 256], sizes = [16, 256], strides = [1, 1]} : vector<16x1024xf32> to vector<16x256xf32>
    %78 = arith.maximumf %76, %77 : vector<16x256xf32>
    %79 = vector.extract_strided_slice %75 {offsets = [0, 512], sizes = [16, 256], strides = [1, 1]} : vector<16x1024xf32> to vector<16x256xf32>
    %80 = vector.extract_strided_slice %75 {offsets = [0, 768], sizes = [16, 256], strides = [1, 1]} : vector<16x1024xf32> to vector<16x256xf32>
    %81 = arith.maximumf %79, %80 : vector<16x256xf32>
    %82 = arith.maximumf %78, %81 : vector<16x256xf32>
    %83 = vector.broadcast %1 : vector<16x1xf32> to vector<16x256xf32>
    %84 = arith.addf %82, %83 : vector<16x256xf32>
    %cst_32 = arith.constant 0.000000e+00 : f32
    %85 = vector.broadcast %cst_32 : f32 to vector<16x256xf32>
    %86 = arith.maximumf %84, %85 : vector<16x256xf32>
    %87 = arith.mulf %86, %3 : vector<16x256xf32>
    %88 = vector.shape_cast %87 : vector<16x256xf32> to vector<1x16x256xf32>
    %cst_33 = arith.constant dense<0.000000e+00> : vector<1xf32>
    %89 = vector.multi_reduction <add>, %88, %cst_33 [1, 2] : vector<1x16x256xf32> to vector<1xf32>
    %90 = vector.shape_cast %89 : vector<1xf32> to vector<1x1x1xf32>
    %91 = vector.extract %90[0, 0, 0] : f32 from vector<1x1x1xf32>
    %92 = vector.broadcast %91 : f32 to vector<1x1xf32>
    %93 = arith.mulf %86, %5 : vector<16x256xf32>
    %94 = vector.shape_cast %93 : vector<16x256xf32> to vector<1x16x256xf32>
    %cst_34 = arith.constant dense<0.000000e+00> : vector<1xf32>
    %95 = vector.multi_reduction <add>, %94, %cst_34 [1, 2] : vector<1x16x256xf32> to vector<1xf32>
    %96 = vector.shape_cast %95 : vector<1xf32> to vector<1x1x1xf32>
    %97 = vector.extract %96[0, 0, 0] : f32 from vector<1x1x1xf32>
    %98 = vector.broadcast %97 : f32 to vector<1x1xf32>
    %99 = tpu.concatenate %92, %98 in 1 : vector<1x1xf32>, vector<1x1xf32> -> vector<1x2xf32>
    %100 = arith.addf %99, %6 : vector<1x2xf32>
    %101 = vector.shape_cast %100 : vector<1x2xf32> to vector<1x2xf32>
    %102 = vector.broadcast %101 : vector<1x2xf32> to vector<8x2xf32>
    %c2_35 = arith.constant 2 : index
    %c0_36 = arith.constant 0 : index
    %c0_37 = arith.constant 0 : index
    %103 = vector.load %arg6[%c2_35, %c0_36, %c0_37] : memref<8x8x2xf32, #tpu.memory_space<vmem>>, vector<1x8x2xf32>
    %104 = vector.shape_cast %103 : vector<1x8x2xf32> to vector<8x2xf32>
    %105 = vector.shape_cast %102 : vector<8x2xf32> to vector<1x8x2xf32>
    tpu.vector_store %arg6[%c2_35, %c0_36, %c0_37], %105 {strides = array<i32>} : memref<8x8x2xf32, #tpu.memory_space<vmem>>, vector<1x8x2xf32>,
    %c3 = arith.constant 3 : index
    %c0_38 = arith.constant 0 : index
    %c0_39 = arith.constant 0 : index
    %106 = vector.load %arg1[%c3, %c0_38, %c0_39] : memref<8x9x1024xf32, #tpu.memory_space<vmem>>, vector<1x9x1024xf32>
    %107 = vector.shape_cast %106 : vector<1x9x1024xf32> to vector<9x1024xf32>
    %cst_40 = arith.constant dense<0.000000e+00> : vector<16x1024xf32>
    %108 = tpu.matmul %0, %107, %cst_40 {dimension_numbers = #tpu.dot_dimension_numbers<[1], [0], [0], [1], [0, 0, 1, 1], [], []>} : vector<16x9xf32>, vector<9x1024xf32>, vector<16x1024xf32> -> vector<16x1024xf32>
    %109 = vector.extract_strided_slice %108 {offsets = [0, 0], sizes = [16, 256], strides = [1, 1]} : vector<16x1024xf32> to vector<16x256xf32>
    %110 = vector.extract_strided_slice %108 {offsets = [0, 256], sizes = [16, 256], strides = [1, 1]} : vector<16x1024xf32> to vector<16x256xf32>
    %111 = arith.maximumf %109, %110 : vector<16x256xf32>
    %112 = vector.extract_strided_slice %108 {offsets = [0, 512], sizes = [16, 256], strides = [1, 1]} : vector<16x1024xf32> to vector<16x256xf32>
    %113 = vector.extract_strided_slice %108 {offsets = [0, 768], sizes = [16, 256], strides = [1, 1]} : vector<16x1024xf32> to vector<16x256xf32>
    %114 = arith.maximumf %112, %113 : vector<16x256xf32>
    %115 = arith.maximumf %111, %114 : vector<16x256xf32>
    %116 = vector.broadcast %1 : vector<16x1xf32> to vector<16x256xf32>
    %117 = arith.addf %115, %116 : vector<16x256xf32>
    %cst_41 = arith.constant 0.000000e+00 : f32
    %118 = vector.broadcast %cst_41 : f32 to vector<16x256xf32>
    %119 = arith.maximumf %117, %118 : vector<16x256xf32>
    %120 = arith.mulf %119, %3 : vector<16x256xf32>
    %121 = vector.shape_cast %120 : vector<16x256xf32> to vector<1x16x256xf32>
    %cst_42 = arith.constant dense<0.000000e+00> : vector<1xf32>
    %122 = vector.multi_reduction <add>, %121, %cst_42 [1, 2] : vector<1x16x256xf32> to vector<1xf32>
    %123 = vector.shape_cast %122 : vector<1xf32> to vector<1x1x1xf32>
    %124 = vector.extract %123[0, 0, 0] : f32 from vector<1x1x1xf32>
    %125 = vector.broadcast %124 : f32 to vector<1x1xf32>
    %126 = arith.mulf %119, %5 : vector<16x256xf32>
    %127 = vector.shape_cast %126 : vector<16x256xf32> to vector<1x16x256xf32>
    %cst_43 = arith.constant dense<0.000000e+00> : vector<1xf32>
    %128 = vector.multi_reduction <add>, %127, %cst_43 [1, 2] : vector<1x16x256xf32> to vector<1xf32>
    %129 = vector.shape_cast %128 : vector<1xf32> to vector<1x1x1xf32>
    %130 = vector.extract %129[0, 0, 0] : f32 from vector<1x1x1xf32>
    %131 = vector.broadcast %130 : f32 to vector<1x1xf32>
    %132 = tpu.concatenate %125, %131 in 1 : vector<1x1xf32>, vector<1x1xf32> -> vector<1x2xf32>
    %133 = arith.addf %132, %6 : vector<1x2xf32>
    %134 = vector.shape_cast %133 : vector<1x2xf32> to vector<1x2xf32>
    %135 = vector.broadcast %134 : vector<1x2xf32> to vector<8x2xf32>
    %c3_44 = arith.constant 3 : index
    %c0_45 = arith.constant 0 : index
    %c0_46 = arith.constant 0 : index
    %136 = vector.load %arg6[%c3_44, %c0_45, %c0_46] : memref<8x8x2xf32, #tpu.memory_space<vmem>>, vector<1x8x2xf32>
    %137 = vector.shape_cast %136 : vector<1x8x2xf32> to vector<8x2xf32>
    %138 = vector.shape_cast %135 : vector<8x2xf32> to vector<1x8x2xf32>
    tpu.vector_store %arg6[%c3_44, %c0_45, %c0_46], %138 {strides = array<i32>} : memref<8x8x2xf32, #tpu.memory_space<vmem>>, vector<1x8x2xf32>,
    %c4 = arith.constant 4 : index
    %c0_47 = arith.constant 0 : index
    %c0_48 = arith.constant 0 : index
    %139 = vector.load %arg1[%c4, %c0_47, %c0_48] : memref<8x9x1024xf32, #tpu.memory_space<vmem>>, vector<1x9x1024xf32>
    %140 = vector.shape_cast %139 : vector<1x9x1024xf32> to vector<9x1024xf32>
    %cst_49 = arith.constant dense<0.000000e+00> : vector<16x1024xf32>
    %141 = tpu.matmul %0, %140, %cst_49 {dimension_numbers = #tpu.dot_dimension_numbers<[1], [0], [0], [1], [0, 0, 1, 1], [], []>} : vector<16x9xf32>, vector<9x1024xf32>, vector<16x1024xf32> -> vector<16x1024xf32>
    %142 = vector.extract_strided_slice %141 {offsets = [0, 0], sizes = [16, 256], strides = [1, 1]} : vector<16x1024xf32> to vector<16x256xf32>
    %143 = vector.extract_strided_slice %141 {offsets = [0, 256], sizes = [16, 256], strides = [1, 1]} : vector<16x1024xf32> to vector<16x256xf32>
    %144 = arith.maximumf %142, %143 : vector<16x256xf32>
    %145 = vector.extract_strided_slice %141 {offsets = [0, 512], sizes = [16, 256], strides = [1, 1]} : vector<16x1024xf32> to vector<16x256xf32>
    %146 = vector.extract_strided_slice %141 {offsets = [0, 768], sizes = [16, 256], strides = [1, 1]} : vector<16x1024xf32> to vector<16x256xf32>
    %147 = arith.maximumf %145, %146 : vector<16x256xf32>
    %148 = arith.maximumf %144, %147 : vector<16x256xf32>
    %149 = vector.broadcast %1 : vector<16x1xf32> to vector<16x256xf32>
    %150 = arith.addf %148, %149 : vector<16x256xf32>
    %cst_50 = arith.constant 0.000000e+00 : f32
    %151 = vector.broadcast %cst_50 : f32 to vector<16x256xf32>
    %152 = arith.maximumf %150, %151 : vector<16x256xf32>
    %153 = arith.mulf %152, %3 : vector<16x256xf32>
    %154 = vector.shape_cast %153 : vector<16x256xf32> to vector<1x16x256xf32>
    %cst_51 = arith.constant dense<0.000000e+00> : vector<1xf32>
    %155 = vector.multi_reduction <add>, %154, %cst_51 [1, 2] : vector<1x16x256xf32> to vector<1xf32>
    %156 = vector.shape_cast %155 : vector<1xf32> to vector<1x1x1xf32>
    %157 = vector.extract %156[0, 0, 0] : f32 from vector<1x1x1xf32>
    %158 = vector.broadcast %157 : f32 to vector<1x1xf32>
    %159 = arith.mulf %152, %5 : vector<16x256xf32>
    %160 = vector.shape_cast %159 : vector<16x256xf32> to vector<1x16x256xf32>
    %cst_52 = arith.constant dense<0.000000e+00> : vector<1xf32>
    %161 = vector.multi_reduction <add>, %160, %cst_52 [1, 2] : vector<1x16x256xf32> to vector<1xf32>
    %162 = vector.shape_cast %161 : vector<1xf32> to vector<1x1x1xf32>
    %163 = vector.extract %162[0, 0, 0] : f32 from vector<1x1x1xf32>
    %164 = vector.broadcast %163 : f32 to vector<1x1xf32>
    %165 = tpu.concatenate %158, %164 in 1 : vector<1x1xf32>, vector<1x1xf32> -> vector<1x2xf32>
    %166 = arith.addf %165, %6 : vector<1x2xf32>
    %167 = vector.shape_cast %166 : vector<1x2xf32> to vector<1x2xf32>
    %168 = vector.broadcast %167 : vector<1x2xf32> to vector<8x2xf32>
    %c4_53 = arith.constant 4 : index
    %c0_54 = arith.constant 0 : index
    %c0_55 = arith.constant 0 : index
    %169 = vector.load %arg6[%c4_53, %c0_54, %c0_55] : memref<8x8x2xf32, #tpu.memory_space<vmem>>, vector<1x8x2xf32>
    %170 = vector.shape_cast %169 : vector<1x8x2xf32> to vector<8x2xf32>
    %171 = vector.shape_cast %168 : vector<8x2xf32> to vector<1x8x2xf32>
    tpu.vector_store %arg6[%c4_53, %c0_54, %c0_55], %171 {strides = array<i32>} : memref<8x8x2xf32, #tpu.memory_space<vmem>>, vector<1x8x2xf32>,
    %c5 = arith.constant 5 : index
    %c0_56 = arith.constant 0 : index
    %c0_57 = arith.constant 0 : index
    %172 = vector.load %arg1[%c5, %c0_56, %c0_57] : memref<8x9x1024xf32, #tpu.memory_space<vmem>>, vector<1x9x1024xf32>
    %173 = vector.shape_cast %172 : vector<1x9x1024xf32> to vector<9x1024xf32>
    %cst_58 = arith.constant dense<0.000000e+00> : vector<16x1024xf32>
    %174 = tpu.matmul %0, %173, %cst_58 {dimension_numbers = #tpu.dot_dimension_numbers<[1], [0], [0], [1], [0, 0, 1, 1], [], []>} : vector<16x9xf32>, vector<9x1024xf32>, vector<16x1024xf32> -> vector<16x1024xf32>
    %175 = vector.extract_strided_slice %174 {offsets = [0, 0], sizes = [16, 256], strides = [1, 1]} : vector<16x1024xf32> to vector<16x256xf32>
    %176 = vector.extract_strided_slice %174 {offsets = [0, 256], sizes = [16, 256], strides = [1, 1]} : vector<16x1024xf32> to vector<16x256xf32>
    %177 = arith.maximumf %175, %176 : vector<16x256xf32>
    %178 = vector.extract_strided_slice %174 {offsets = [0, 512], sizes = [16, 256], strides = [1, 1]} : vector<16x1024xf32> to vector<16x256xf32>
    %179 = vector.extract_strided_slice %174 {offsets = [0, 768], sizes = [16, 256], strides = [1, 1]} : vector<16x1024xf32> to vector<16x256xf32>
    %180 = arith.maximumf %178, %179 : vector<16x256xf32>
    %181 = arith.maximumf %177, %180 : vector<16x256xf32>
    %182 = vector.broadcast %1 : vector<16x1xf32> to vector<16x256xf32>
    %183 = arith.addf %181, %182 : vector<16x256xf32>
    %cst_59 = arith.constant 0.000000e+00 : f32
    %184 = vector.broadcast %cst_59 : f32 to vector<16x256xf32>
    %185 = arith.maximumf %183, %184 : vector<16x256xf32>
    %186 = arith.mulf %185, %3 : vector<16x256xf32>
    %187 = vector.shape_cast %186 : vector<16x256xf32> to vector<1x16x256xf32>
    %cst_60 = arith.constant dense<0.000000e+00> : vector<1xf32>
    %188 = vector.multi_reduction <add>, %187, %cst_60 [1, 2] : vector<1x16x256xf32> to vector<1xf32>
    %189 = vector.shape_cast %188 : vector<1xf32> to vector<1x1x1xf32>
    %190 = vector.extract %189[0, 0, 0] : f32 from vector<1x1x1xf32>
    %191 = vector.broadcast %190 : f32 to vector<1x1xf32>
    %192 = arith.mulf %185, %5 : vector<16x256xf32>
    %193 = vector.shape_cast %192 : vector<16x256xf32> to vector<1x16x256xf32>
    %cst_61 = arith.constant dense<0.000000e+00> : vector<1xf32>
    %194 = vector.multi_reduction <add>, %193, %cst_61 [1, 2] : vector<1x16x256xf32> to vector<1xf32>
    %195 = vector.shape_cast %194 : vector<1xf32> to vector<1x1x1xf32>
    %196 = vector.extract %195[0, 0, 0] : f32 from vector<1x1x1xf32>
    %197 = vector.broadcast %196 : f32 to vector<1x1xf32>
    %198 = tpu.concatenate %191, %197 in 1 : vector<1x1xf32>, vector<1x1xf32> -> vector<1x2xf32>
    %199 = arith.addf %198, %6 : vector<1x2xf32>
    %200 = vector.shape_cast %199 : vector<1x2xf32> to vector<1x2xf32>
    %201 = vector.broadcast %200 : vector<1x2xf32> to vector<8x2xf32>
    %c5_62 = arith.constant 5 : index
    %c0_63 = arith.constant 0 : index
    %c0_64 = arith.constant 0 : index
    %202 = vector.load %arg6[%c5_62, %c0_63, %c0_64] : memref<8x8x2xf32, #tpu.memory_space<vmem>>, vector<1x8x2xf32>
    %203 = vector.shape_cast %202 : vector<1x8x2xf32> to vector<8x2xf32>
    %204 = vector.shape_cast %201 : vector<8x2xf32> to vector<1x8x2xf32>
    tpu.vector_store %arg6[%c5_62, %c0_63, %c0_64], %204 {strides = array<i32>} : memref<8x8x2xf32, #tpu.memory_space<vmem>>, vector<1x8x2xf32>,
    %c6 = arith.constant 6 : index
    %c0_65 = arith.constant 0 : index
    %c0_66 = arith.constant 0 : index
    %205 = vector.load %arg1[%c6, %c0_65, %c0_66] : memref<8x9x1024xf32, #tpu.memory_space<vmem>>, vector<1x9x1024xf32>
    %206 = vector.shape_cast %205 : vector<1x9x1024xf32> to vector<9x1024xf32>
    %cst_67 = arith.constant dense<0.000000e+00> : vector<16x1024xf32>
    %207 = tpu.matmul %0, %206, %cst_67 {dimension_numbers = #tpu.dot_dimension_numbers<[1], [0], [0], [1], [0, 0, 1, 1], [], []>} : vector<16x9xf32>, vector<9x1024xf32>, vector<16x1024xf32> -> vector<16x1024xf32>
    %208 = vector.extract_strided_slice %207 {offsets = [0, 0], sizes = [16, 256], strides = [1, 1]} : vector<16x1024xf32> to vector<16x256xf32>
    %209 = vector.extract_strided_slice %207 {offsets = [0, 256], sizes = [16, 256], strides = [1, 1]} : vector<16x1024xf32> to vector<16x256xf32>
    %210 = arith.maximumf %208, %209 : vector<16x256xf32>
    %211 = vector.extract_strided_slice %207 {offsets = [0, 512], sizes = [16, 256], strides = [1, 1]} : vector<16x1024xf32> to vector<16x256xf32>
    %212 = vector.extract_strided_slice %207 {offsets = [0, 768], sizes = [16, 256], strides = [1, 1]} : vector<16x1024xf32> to vector<16x256xf32>
    %213 = arith.maximumf %211, %212 : vector<16x256xf32>
    %214 = arith.maximumf %210, %213 : vector<16x256xf32>
    %215 = vector.broadcast %1 : vector<16x1xf32> to vector<16x256xf32>
    %216 = arith.addf %214, %215 : vector<16x256xf32>
    %cst_68 = arith.constant 0.000000e+00 : f32
    %217 = vector.broadcast %cst_68 : f32 to vector<16x256xf32>
    %218 = arith.maximumf %216, %217 : vector<16x256xf32>
    %219 = arith.mulf %218, %3 : vector<16x256xf32>
    %220 = vector.shape_cast %219 : vector<16x256xf32> to vector<1x16x256xf32>
    %cst_69 = arith.constant dense<0.000000e+00> : vector<1xf32>
    %221 = vector.multi_reduction <add>, %220, %cst_69 [1, 2] : vector<1x16x256xf32> to vector<1xf32>
    %222 = vector.shape_cast %221 : vector<1xf32> to vector<1x1x1xf32>
    %223 = vector.extract %222[0, 0, 0] : f32 from vector<1x1x1xf32>
    %224 = vector.broadcast %223 : f32 to vector<1x1xf32>
    %225 = arith.mulf %218, %5 : vector<16x256xf32>
    %226 = vector.shape_cast %225 : vector<16x256xf32> to vector<1x16x256xf32>
    %cst_70 = arith.constant dense<0.000000e+00> : vector<1xf32>
    %227 = vector.multi_reduction <add>, %226, %cst_70 [1, 2] : vector<1x16x256xf32> to vector<1xf32>
    %228 = vector.shape_cast %227 : vector<1xf32> to vector<1x1x1xf32>
    %229 = vector.extract %228[0, 0, 0] : f32 from vector<1x1x1xf32>
    %230 = vector.broadcast %229 : f32 to vector<1x1xf32>
    %231 = tpu.concatenate %224, %230 in 1 : vector<1x1xf32>, vector<1x1xf32> -> vector<1x2xf32>
    %232 = arith.addf %231, %6 : vector<1x2xf32>
    %233 = vector.shape_cast %232 : vector<1x2xf32> to vector<1x2xf32>
    %234 = vector.broadcast %233 : vector<1x2xf32> to vector<8x2xf32>
    %c6_71 = arith.constant 6 : index
    %c0_72 = arith.constant 0 : index
    %c0_73 = arith.constant 0 : index
    %235 = vector.load %arg6[%c6_71, %c0_72, %c0_73] : memref<8x8x2xf32, #tpu.memory_space<vmem>>, vector<1x8x2xf32>
    %236 = vector.shape_cast %235 : vector<1x8x2xf32> to vector<8x2xf32>
    %237 = vector.shape_cast %234 : vector<8x2xf32> to vector<1x8x2xf32>
    tpu.vector_store %arg6[%c6_71, %c0_72, %c0_73], %237 {strides = array<i32>} : memref<8x8x2xf32, #tpu.memory_space<vmem>>, vector<1x8x2xf32>,
    %c7 = arith.constant 7 : index
    %c0_74 = arith.constant 0 : index
    %c0_75 = arith.constant 0 : index
    %238 = vector.load %arg1[%c7, %c0_74, %c0_75] : memref<8x9x1024xf32, #tpu.memory_space<vmem>>, vector<1x9x1024xf32>
    %239 = vector.shape_cast %238 : vector<1x9x1024xf32> to vector<9x1024xf32>
    %cst_76 = arith.constant dense<0.000000e+00> : vector<16x1024xf32>
    %240 = tpu.matmul %0, %239, %cst_76 {dimension_numbers = #tpu.dot_dimension_numbers<[1], [0], [0], [1], [0, 0, 1, 1], [], []>} : vector<16x9xf32>, vector<9x1024xf32>, vector<16x1024xf32> -> vector<16x1024xf32>
    %241 = vector.extract_strided_slice %240 {offsets = [0, 0], sizes = [16, 256], strides = [1, 1]} : vector<16x1024xf32> to vector<16x256xf32>
    %242 = vector.extract_strided_slice %240 {offsets = [0, 256], sizes = [16, 256], strides = [1, 1]} : vector<16x1024xf32> to vector<16x256xf32>
    %243 = arith.maximumf %241, %242 : vector<16x256xf32>
    %244 = vector.extract_strided_slice %240 {offsets = [0, 512], sizes = [16, 256], strides = [1, 1]} : vector<16x1024xf32> to vector<16x256xf32>
    %245 = vector.extract_strided_slice %240 {offsets = [0, 768], sizes = [16, 256], strides = [1, 1]} : vector<16x1024xf32> to vector<16x256xf32>
    %246 = arith.maximumf %244, %245 : vector<16x256xf32>
    %247 = arith.maximumf %243, %246 : vector<16x256xf32>
    %248 = vector.broadcast %1 : vector<16x1xf32> to vector<16x256xf32>
    %249 = arith.addf %247, %248 : vector<16x256xf32>
    %cst_77 = arith.constant 0.000000e+00 : f32
    %250 = vector.broadcast %cst_77 : f32 to vector<16x256xf32>
    %251 = arith.maximumf %249, %250 : vector<16x256xf32>
    %252 = arith.mulf %251, %3 : vector<16x256xf32>
    %253 = vector.shape_cast %252 : vector<16x256xf32> to vector<1x16x256xf32>
    %cst_78 = arith.constant dense<0.000000e+00> : vector<1xf32>
    %254 = vector.multi_reduction <add>, %253, %cst_78 [1, 2] : vector<1x16x256xf32> to vector<1xf32>
    %255 = vector.shape_cast %254 : vector<1xf32> to vector<1x1x1xf32>
    %256 = vector.extract %255[0, 0, 0] : f32 from vector<1x1x1xf32>
    %257 = vector.broadcast %256 : f32 to vector<1x1xf32>
    %258 = arith.mulf %251, %5 : vector<16x256xf32>
    %259 = vector.shape_cast %258 : vector<16x256xf32> to vector<1x16x256xf32>
    %cst_79 = arith.constant dense<0.000000e+00> : vector<1xf32>
    %260 = vector.multi_reduction <add>, %259, %cst_79 [1, 2] : vector<1x16x256xf32> to vector<1xf32>
    %261 = vector.shape_cast %260 : vector<1xf32> to vector<1x1x1xf32>
    %262 = vector.extract %261[0, 0, 0] : f32 from vector<1x1x1xf32>
    %263 = vector.broadcast %262 : f32 to vector<1x1xf32>
    %264 = tpu.concatenate %257, %263 in 1 : vector<1x1xf32>, vector<1x1xf32> -> vector<1x2xf32>
    %265 = arith.addf %264, %6 : vector<1x2xf32>
    %266 = vector.shape_cast %265 : vector<1x2xf32> to vector<1x2xf32>
    %267 = vector.broadcast %266 : vector<1x2xf32> to vector<8x2xf32>
    %c7_80 = arith.constant 7 : index
    %c0_81 = arith.constant 0 : index
    %c0_82 = arith.constant 0 : index
    %268 = vector.load %arg6[%c7_80, %c0_81, %c0_82] : memref<8x8x2xf32, #tpu.memory_space<vmem>>, vector<1x8x2xf32>
    %269 = vector.shape_cast %268 : vector<1x8x2xf32> to vector<8x2xf32>
    %270 = vector.shape_cast %267 : vector<8x2xf32> to vector<1x8x2xf32>
    tpu.vector_store %arg6[%c7_80, %c0_81, %c0_82], %270 {strides = array<i32>} : memref<8x8x2xf32, #tpu.memory_space<vmem>>, vector<1x8x2xf32>,
    return
  }
  func.func @transform_0(%arg0: i32) -> (i32, i32, i32) {
    %c0_i32 = arith.constant 0 : i32
    %c0_i32_0 = arith.constant 0 : i32
    %c0_i32_1 = arith.constant 0 : i32
    return %arg0, %c0_i32, %c0_i32_0 : i32, i32, i32
  }
  func.func @transform_1(%arg0: i32) -> (i32, i32) {
    %c0_i32 = arith.constant 0 : i32
    %c0_i32_0 = arith.constant 0 : i32
    %c0_i32_1 = arith.constant 0 : i32
    return %c0_i32, %c0_i32_0 : i32, i32
  }
  func.func @transform_2(%arg0: i32) -> (i32, i32) {
    %c0_i32 = arith.constant 0 : i32
    %c0_i32_0 = arith.constant 0 : i32
    %c0_i32_1 = arith.constant 0 : i32
    return %c0_i32, %c0_i32_0 : i32, i32
  }
  func.func @transform_3(%arg0: i32) -> (i32, i32, i32) {
    %c0_i32 = arith.constant 0 : i32
    %c0_i32_0 = arith.constant 0 : i32
    %c0_i32_1 = arith.constant 0 : i32
    %c0_i32_2 = arith.constant 0 : i32
    return %c0_i32, %c0_i32_0, %c0_i32_1 : i32, i32, i32
  }
  func.func @transform_4(%arg0: i32) -> (i32, i32) {
    %c0_i32 = arith.constant 0 : i32
    %c0_i32_0 = arith.constant 0 : i32
    %c0_i32_1 = arith.constant 0 : i32
    return %c0_i32, %c0_i32_0 : i32, i32
  }
  func.func @transform_5(%arg0: i32) -> (i32, i32, i32) {
    %c0_i32 = arith.constant 0 : i32
    %c0_i32_0 = arith.constant 0 : i32
    %c0_i32_1 = arith.constant 0 : i32
    return %arg0, %c0_i32, %c0_i32_0 : i32, i32, i32
  }
}

</mosaic_0001>

<llo_original>
// kernel: simple_cnn_forward.1
$region0: #{simple_cnn_forward.1}
  #allocation0 [shape = 'u32[]', space=smem, size = 0x4, offset = 0x4, fixed_abs, tag = 'smem constant byte address 0x4 - core index']
  #allocation1 [shape = 'u32[72,128]{1,0:T(1,128)}', space=vmem, size = 0x9000, scoped, tag = 'internal scratch']
  %s0 = inlined_call_operand.vmem [shape: f32[8,9,1024], index: 0, kind: input, shape index: {}]
  %s1 = inlined_call_operand.vmem [shape: f32[16,9], index: 1, kind: input, shape index: {}]
  %s2 = inlined_call_operand.vmem [shape: f32[16,1], index: 2, kind: input, shape index: {}]
  %s3 = inlined_call_operand.vmem [shape: f32[2,16,256], index: 3, kind: input, shape index: {}]
  %s4 = inlined_call_operand.vmem [shape: f32[1,2], index: 4, kind: input, shape index: {}]
  %s5 = inlined_call_operand.vmem [shape: f32[8,8,2], index: 5, kind: output, shape index: {}]
  %s6 = sld [smem:[#allocation0]]
  $region30: #{simple_cnn_forward.1} parent=0
    _
  %s8 = ssub.s32 1, %s6
  %s9 = scalar_select 0, %s8, %s6
  // Predicated region
  $region2: #{simple_cnn_forward.1} parent=0 // pred_check
    _
  $region3: #{simple_cnn_forward.1} parent=0 // pred_check_branch
    %11 = sbr.rel (0) target = $region5
  $region4: #{simple_cnn_forward.1} parent=0 // pred_region
    _
  $region5: #{simple_cnn_forward.1} parent=0 // pred_fallthru
    _
  // Predicated region
  $region6: #{simple_cnn_forward.1} parent=0 // pred_check
    _
  $region7: #{simple_cnn_forward.1} parent=0 // pred_check_branch
    %13 = sbr.rel (0) target = $region9
  $region8: #{simple_cnn_forward.1} parent=0 // pred_region
    _
  $region9: #{simple_cnn_forward.1} parent=0 // pred_fallthru
    _
  // Predicated region
  $region10: #{simple_cnn_forward.1} parent=0 // pred_check
    _
  $region11: #{simple_cnn_forward.1} parent=0 // pred_check_branch
    %15 = sbr.rel (0) target = $region13
  $region12: #{simple_cnn_forward.1} parent=0 // pred_region
    _
  $region13: #{simple_cnn_forward.1} parent=0 // pred_fallthru
    _
  // Predicated region
  $region14: #{simple_cnn_forward.1} parent=0 // pred_check
    _
  $region15: #{simple_cnn_forward.1} parent=0 // pred_check_branch
    %17 = sbr.rel (0) target = $region17
  $region16: #{simple_cnn_forward.1} parent=0 // pred_region
    _
  $region17: #{simple_cnn_forward.1} parent=0 // pred_fallthru
    _
  // Predicated region
  $region18: #{simple_cnn_forward.1} parent=0 // pred_check
    _
  $region19: #{simple_cnn_forward.1} parent=0 // pred_check_branch
    %19 = sbr.rel (0) target = $region21
  $region20: #{simple_cnn_forward.1} parent=0 // pred_region
    _
  $region21: #{simple_cnn_forward.1} parent=0 // pred_fallthru
    _
  %v20 = vld [vmem:[%s1] sm:$0xff]
  %v21 = vld [vmem:[%s1 + $0x8] sm:$0xff]
  %v22 = vld [vmem:[%s2] sm:$0xff]
  %v23 = vld [vmem:[%s2 + $0x8] sm:$0xff]
  %v24 = vld [vmem:[%s3] sm:$0xff]
  %v25 = vld [vmem:[%s3 + $0x8] sm:$0xff]
  %v26 = vld [vmem:[%s3 + $0x10] sm:$0xff]
  %v27 = vld [vmem:[%s3 + $0x18] sm:$0xff]
  %s28 = scalar_lea.vmem %s3, 32
  %v29 = vld [vmem:[%s28] sm:$0xff]
  %v30 = vld [vmem:[%s28 + $0x8] sm:$0xff]
  %v31 = vld [vmem:[%s28 + $0x10] sm:$0xff]
  %v32 = vld [vmem:[%s28 + $0x18] sm:$0xff]
  %v33 = vld [vmem:[%s4] sm:$0x1]
  %v34 = vld [vmem:[%s0] sm:$0xff]
  %v35 = vld [vmem:[%s0 + $0x8] sm:$0xff]
  %v36 = vld [vmem:[%s0 + $0x10] sm:$0xff]
  %v37 = vld [vmem:[%s0 + $0x18] sm:$0xff]
  %v38 = vld [vmem:[%s0 + $0x20] sm:$0xff]
  %v39 = vld [vmem:[%s0 + $0x28] sm:$0xff]
  %v40 = vld [vmem:[%s0 + $0x30] sm:$0xff]
  %v41 = vld [vmem:[%s0 + $0x38] sm:$0xff]
  %v42 = vld [vmem:[%s0 + $0x40] sm:$0x1]
  %v43 = vld [vmem:[%s0 + $0x48] sm:$0x1]
  %v44 = vld [vmem:[%s0 + $0x50] sm:$0x1]
  %v45 = vld [vmem:[%s0 + $0x58] sm:$0x1]
  %v46 = vld [vmem:[%s0 + $0x60] sm:$0x1]
  %v47 = vld [vmem:[%s0 + $0x68] sm:$0x1]
  %v48 = vld [vmem:[%s0 + $0x70] sm:$0x1]
  %v49 = vld [vmem:[%s0 + $0x78] sm:$0x1]
  %vm50 = vcmask 72704
  %v52 = vsel %vm50, %v20, 0
  %v55 = vsel %vm50, %v21, 0
  %vm57 = vcmask 1040384
  %v59 = vsel %vm57, %v42, 0
  %v62 = vsel %vm57, %v43, 0
  %v65 = vsel %vm57, %v44, 0
  %v68 = vsel %vm57, %v45, 0
  %v71 = vsel %vm57, %v46, 0
  %v74 = vsel %vm57, %v47, 0
  %v77 = vsel %vm57, %v48, 0
  %v80 = vsel %vm57, %v49, 0
  %82 = vmatpush.msra.mxu0 0.0
  %83 = vmatpush.msra.mxu0 0.0
  %84 = vmatpush.msra.mxu0 0.0
  %85 = vmatpush.msra.mxu0 0.0
  %86 = vmatpush.msra.mxu0 0.0
  %87 = vmatpush.msra.mxu0 0.0
  %88 = vmatpush.msra.mxu0 0.0
  %89 = vmatpush.msra.mxu0 0.0
  %90 = vmatpush.msra.mxu0 0.0
  %91 = vmatpush.msra.mxu0 0.0
  %92 = vmatpush.msra.mxu0 0.0
  %93 = vmatpush.msra.mxu0 0.0
  %94 = vmatpush.msra.mxu0 0.0
  %95 = vmatpush.msra.mxu0 0.0
  %96 = vmatpush.msra.mxu0 %v59
  %97 = vmatpush.msra.mxu0 %v34
  %98 = vmatmul.f32.gmra.mxu0 %v52
  %v99 = vpop.f32.mrf.mxu0
  %v100 = vadd.f32 0.0, %v99
  %101 = vmatmul.f32.gmra.mxu0 %v55
  %v102 = vpop.f32.mrf.mxu0
  %v103 = vadd.f32 0.0, %v102
  %104 = vdwg.mxu0
  %105 = vmatpush.msra.mxu0 0.0
  %106 = vmatpush.msra.mxu0 0.0
  %107 = vmatpush.msra.mxu0 0.0
  %108 = vmatpush.msra.mxu0 0.0
  %109 = vmatpush.msra.mxu0 0.0
  %110 = vmatpush.msra.mxu0 0.0
  %111 = vmatpush.msra.mxu0 0.0
  %112 = vmatpush.msra.mxu0 0.0
  %113 = vmatpush.msra.mxu0 0.0
  %114 = vmatpush.msra.mxu0 0.0
  %115 = vmatpush.msra.mxu0 0.0
  %116 = vmatpush.msra.mxu0 0.0
  %117 = vmatpush.msra.mxu0 0.0
  %118 = vmatpush.msra.mxu0 0.0
  %119 = vmatpush.msra.mxu0 %v62
  %120 = vmatpush.msra.mxu0 %v35
  %121 = vmatmul.f32.gmra.mxu0 %v52
  %v122 = vpop.f32.mrf.mxu0
  %v123 = vadd.f32 0.0, %v122
  %124 = vmatmul.f32.gmra.mxu0 %v55
  %v125 = vpop.f32.mrf.mxu0
  %v126 = vadd.f32 0.0, %v125
  %127 = vdwg.mxu0
  %128 = vmatpush.msra.mxu0 0.0
  %129 = vmatpush.msra.mxu0 0.0
  %130 = vmatpush.msra.mxu0 0.0
  %131 = vmatpush.msra.mxu0 0.0
  %132 = vmatpush.msra.mxu0 0.0
  %133 = vmatpush.msra.mxu0 0.0
  %134 = vmatpush.msra.mxu0 0.0
  %135 = vmatpush.msra.mxu0 0.0
  %136 = vmatpush.msra.mxu0 0.0
  %137 = vmatpush.msra.mxu0 0.0
  %138 = vmatpush.msra.mxu0 0.0
  %139 = vmatpush.msra.mxu0 0.0
  %140 = vmatpush.msra.mxu0 0.0
  %141 = vmatpush.msra.mxu0 0.0
  %142 = vmatpush.msra.mxu0 %v65
  %143 = vmatpush.msra.mxu0 %v36
  %144 = vmatmul.f32.gmra.mxu0 %v52
  %v145 = vpop.f32.mrf.mxu0
  %v146 = vadd.f32 0.0, %v145
  %147 = vmatmul.f32.gmra.mxu0 %v55
  %v148 = vpop.f32.mrf.mxu0
  %v149 = vadd.f32 0.0, %v148
  %150 = vdwg.mxu0
  %151 = vmatpush.msra.mxu0 0.0
  %152 = vmatpush.msra.mxu0 0.0
  %153 = vmatpush.msra.mxu0 0.0
  %154 = vmatpush.msra.mxu0 0.0
  %155 = vmatpush.msra.mxu0 0.0
  %156 = vmatpush.msra.mxu0 0.0
  %157 = vmatpush.msra.mxu0 0.0
  %158 = vmatpush.msra.mxu0 0.0
  %159 = vmatpush.msra.mxu0 0.0
  %160 = vmatpush.msra.mxu0 0.0
  %161 = vmatpush.msra.mxu0 0.0
  %162 = vmatpush.msra.mxu0 0.0
  %163 = vmatpush.msra.mxu0 0.0
  %164 = vmatpush.msra.mxu0 0.0
  %165 = vmatpush.msra.mxu0 %v68
  %166 = vmatpush.msra.mxu0 %v37
  %167 = vmatmul.f32.gmra.mxu0 %v52
  %v168 = vpop.f32.mrf.mxu0
  %v169 = vadd.f32 0.0, %v168
  %170 = vmatmul.f32.gmra.mxu0 %v55
  %v171 = vpop.f32.mrf.mxu0
  %v172 = vadd.f32 0.0, %v171
  %173 = vdwg.mxu0
  %174 = vmatpush.msra.mxu0 0.0
  %175 = vmatpush.msra.mxu0 0.0
  %176 = vmatpush.msra.mxu0 0.0
  %177 = vmatpush.msra.mxu0 0.0
  %178 = vmatpush.msra.mxu0 0.0
  %179 = vmatpush.msra.mxu0 0.0
  %180 = vmatpush.msra.mxu0 0.0
  %181 = vmatpush.msra.mxu0 0.0
  %182 = vmatpush.msra.mxu0 0.0
  %183 = vmatpush.msra.mxu0 0.0
  %184 = vmatpush.msra.mxu0 0.0
  %185 = vmatpush.msra.mxu0 0.0
  %186 = vmatpush.msra.mxu0 0.0
  %187 = vmatpush.msra.mxu0 0.0
  %188 = vmatpush.msra.mxu0 %v71
  %189 = vmatpush.msra.mxu0 %v38
  %190 = vmatmul.f32.gmra.mxu0 %v52
  %v191 = vpop.f32.mrf.mxu0
  %v192 = vadd.f32 0.0, %v191
  %193 = vmatmul.f32.gmra.mxu0 %v55
  %v194 = vpop.f32.mrf.mxu0
  %v195 = vadd.f32 0.0, %v194
  %196 = vdwg.mxu0
  %197 = vmatpush.msra.mxu0 0.0
  %198 = vmatpush.msra.mxu0 0.0
  %199 = vmatpush.msra.mxu0 0.0
  %200 = vmatpush.msra.mxu0 0.0
  %201 = vmatpush.msra.mxu0 0.0
  %202 = vmatpush.msra.mxu0 0.0
  %203 = vmatpush.msra.mxu0 0.0
  %204 = vmatpush.msra.mxu0 0.0
  %205 = vmatpush.msra.mxu0 0.0
  %206 = vmatpush.msra.mxu0 0.0
  %207 = vmatpush.msra.mxu0 0.0
  %208 = vmatpush.msra.mxu0 0.0
  %209 = vmatpush.msra.mxu0 0.0
  %210 = vmatpush.msra.mxu0 0.0
  %211 = vmatpush.msra.mxu0 %v74
  %212 = vmatpush.msra.mxu0 %v39
  %213 = vmatmul.f32.gmra.mxu0 %v52
  %v214 = vpop.f32.mrf.mxu0
  %v215 = vadd.f32 0.0, %v214
  %216 = vmatmul.f32.gmra.mxu0 %v55
  %v217 = vpop.f32.mrf.mxu0
  %v218 = vadd.f32 0.0, %v217
  %219 = vdwg.mxu0
  %220 = vmatpush.msra.mxu0 0.0
  %221 = vmatpush.msra.mxu0 0.0
  %222 = vmatpush.msra.mxu0 0.0
  %223 = vmatpush.msra.mxu0 0.0
  %224 = vmatpush.msra.mxu0 0.0
  %225 = vmatpush.msra.mxu0 0.0
  %226 = vmatpush.msra.mxu0 0.0
  %227 = vmatpush.msra.mxu0 0.0
  %228 = vmatpush.msra.mxu0 0.0
  %229 = vmatpush.msra.mxu0 0.0
  %230 = vmatpush.msra.mxu0 0.0
  %231 = vmatpush.msra.mxu0 0.0
  %232 = vmatpush.msra.mxu0 0.0
  %233 = vmatpush.msra.mxu0 0.0
  %234 = vmatpush.msra.mxu0 %v77
  %235 = vmatpush.msra.mxu0 %v40
  %236 = vmatmul.f32.gmra.mxu0 %v52
  %v237 = vpop.f32.mrf.mxu0
  %v238 = vadd.f32 0.0, %v237
  %239 = vmatmul.f32.gmra.mxu0 %v55
  %v240 = vpop.f32.mrf.mxu0
  %v241 = vadd.f32 0.0, %v240
  %242 = vdwg.mxu0
  %243 = vmatpush.msra.mxu0 0.0
  %244 = vmatpush.msra.mxu0 0.0
  %245 = vmatpush.msra.mxu0 0.0
  %246 = vmatpush.msra.mxu0 0.0
  %247 = vmatpush.msra.mxu0 0.0
  %248 = vmatpush.msra.mxu0 0.0
  %249 = vmatpush.msra.mxu0 0.0
  %250 = vmatpush.msra.mxu0 0.0
  %251 = vmatpush.msra.mxu0 0.0
  %252 = vmatpush.msra.mxu0 0.0
  %253 = vmatpush.msra.mxu0 0.0
  %254 = vmatpush.msra.mxu0 0.0
  %255 = vmatpush.msra.mxu0 0.0
  %256 = vmatpush.msra.mxu0 0.0
  %257 = vmatpush.msra.mxu0 %v80
  %258 = vmatpush.msra.mxu0 %v41
  %259 = vmatmul.f32.gmra.mxu0 %v52
  %v260 = vpop.f32.mrf.mxu0
  %v261 = vadd.f32 0.0, %v260
  %262 = vmatmul.f32.gmra.mxu0 %v55
  %v263 = vpop.f32.mrf.mxu0
  %v264 = vadd.f32 0.0, %v263
  %265 = vdwg.mxu0
  %v266 = vmax.f32 %v100, %v146
  %v267 = vmax.f32 %v123, %v169
  %v268 = vmax.f32 %v103, %v149
  %v269 = vmax.f32 %v126, %v172
  %v270 = vmax.f32 %v192, %v238
  %v271 = vmax.f32 %v215, %v261
  %v272 = vmax.f32 %v195, %v241
  %v273 = vmax.f32 %v218, %v264
  %v274 = vmax.f32 %v266, %v270
  %v275 = vmax.f32 %v267, %v271
  %v276 = vmax.f32 %v268, %v272
  %v277 = vmax.f32 %v269, %v273
  %279 = vset.pattern.permute.xlu0 0
  %280 = vperm.xlu0 %279, %v22
  %v281 = vpop.permute.xlu0 %280
  %284 = vset.pattern.permute.xlu0 0
  %285 = vperm.xlu0 %284, %v23
  %v286 = vpop.permute.xlu0 %285
  %v288 = vadd.f32 %v274, %v281
  %v289 = vadd.f32 %v275, %v281
  %v290 = vadd.f32 %v276, %v286
  %v291 = vadd.f32 %v277, %v286
  %v292 = vmax.f32 %v288, 0.0
  %v293 = vmax.f32 %v289, 0.0
  %v294 = vmax.f32 %v290, 0.0
  %v295 = vmax.f32 %v291, 0.0
  %v296 = vmul.f32 %v292, %v24
  %v297 = vmul.f32 %v293, %v25
  %v298 = vmul.f32 %v294, %v26
  %v299 = vmul.f32 %v295, %v27
  %v300 = vadd.f32 %v296, %v297
  %v301 = vadd.f32 %v300, %v298
  %v302 = vadd.f32 %v301, %v299
  %303 = vadd.xlane.f32.xlu0 %v302
  %v304 = vpop.xlane.xlu0 %303
  %v305 = vrot.slane %v304, 4
  %v306 = vadd.f32 %v304, %v305
  %v307 = vrot.slane %v306, 2
  %v308 = vadd.f32 %v306, %v307
  %v309 = vrot.slane %v308, 1
  %v310 = vadd.f32 %v308, %v309
  %s311 = vtos %v310
  %v312 = vstv %s311
  %v313 = vmul.f32 %v292, %v29
  %v314 = vmul.f32 %v293, %v30
  %v315 = vmul.f32 %v294, %v31
  %v316 = vmul.f32 %v295, %v32
  %v317 = vadd.f32 %v313, %v314
  %v318 = vadd.f32 %v317, %v315
  %v319 = vadd.f32 %v318, %v316
  %320 = vadd.xlane.f32.xlu0 %v319
  %v321 = vpop.xlane.xlu0 %320
  %v322 = vrot.slane %v321, 4
  %v323 = vadd.f32 %v321, %v322
  %v324 = vrot.slane %v323, 2
  %v325 = vadd.f32 %v323, %v324
  %v326 = vrot.slane %v325, 1
  %v327 = vadd.f32 %v325, %v326
  %s328 = vtos %v327
  %v329 = vstv %s328
  %vm330 = vcmask 7168
  %v331 = vsel %vm330, %v312, %v329
  %v332 = vadd.f32 %v331, %v33
  %v333 = vperm.slane %v332, 0
  %vm334 = vcmask 15360
  %335 = vst.msk [vmem:[%s5] sm:$0xff] %vm334, %v333
  %s336 = scalar_lea.vmem %s0, 128
  %v337 = vld [vmem:[%s336] sm:$0xff]
  %v338 = vld [vmem:[%s336 + $0x8] sm:$0xff]
  %v339 = vld [vmem:[%s336 + $0x10] sm:$0xff]
  %v340 = vld [vmem:[%s336 + $0x18] sm:$0xff]
  %v341 = vld [vmem:[%s336 + $0x20] sm:$0xff]
  %v342 = vld [vmem:[%s336 + $0x28] sm:$0xff]
  %v343 = vld [vmem:[%s336 + $0x30] sm:$0xff]
  %v344 = vld [vmem:[%s336 + $0x38] sm:$0xff]
  %v345 = vld [vmem:[%s336 + $0x40] sm:$0x1]
  %v346 = vld [vmem:[%s336 + $0x48] sm:$0x1]
  %v347 = vld [vmem:[%s336 + $0x50] sm:$0x1]
  %v348 = vld [vmem:[%s336 + $0x58] sm:$0x1]
  %v349 = vld [vmem:[%s336 + $0x60] sm:$0x1]
  %v350 = vld [vmem:[%s336 + $0x68] sm:$0x1]
  %v351 = vld [vmem:[%s336 + $0x70] sm:$0x1]
  %v352 = vld [vmem:[%s336 + $0x78] sm:$0x1]
  %v354 = vsel %vm57, %v345, 0
  %v357 = vsel %vm57, %v346, 0
  %v360 = vsel %vm57, %v347, 0
  %v363 = vsel %vm57, %v348, 0
  %v366 = vsel %vm57, %v349, 0
  %v369 = vsel %vm57, %v350, 0
  %v372 = vsel %vm57, %v351, 0
  %v375 = vsel %vm57, %v352, 0
  %377 = vmatpush.msra.mxu0 0.0
  %378 = vmatpush.msra.mxu0 0.0
  %379 = vmatpush.msra.mxu0 0.0
  %380 = vmatpush.msra.mxu0 0.0
  %381 = vmatpush.msra.mxu0 0.0
  %382 = vmatpush.msra.mxu0 0.0
  %383 = vmatpush.msra.mxu0 0.0
  %384 = vmatpush.msra.mxu0 0.0
  %385 = vmatpush.msra.mxu0 0.0
  %386 = vmatpush.msra.mxu0 0.0
  %387 = vmatpush.msra.mxu0 0.0
  %388 = vmatpush.msra.mxu0 0.0
  %389 = vmatpush.msra.mxu0 0.0
  %390 = vmatpush.msra.mxu0 0.0
  %391 = vmatpush.msra.mxu0 %v354
  %392 = vmatpush.msra.mxu0 %v337
  %393 = vmatmul.f32.gmra.mxu0 %v52
  %v394 = vpop.f32.mrf.mxu0
  %v395 = vadd.f32 0.0, %v394
  %396 = vmatmul.f32.gmra.mxu0 %v55
  %v397 = vpop.f32.mrf.mxu0
  %v398 = vadd.f32 0.0, %v397
  %399 = vdwg.mxu0
  %400 = vmatpush.msra.mxu0 0.0
  %401 = vmatpush.msra.mxu0 0.0
  %402 = vmatpush.msra.mxu0 0.0
  %403 = vmatpush.msra.mxu0 0.0
  %404 = vmatpush.msra.mxu0 0.0
  %405 = vmatpush.msra.mxu0 0.0
  %406 = vmatpush.msra.mxu0 0.0
  %407 = vmatpush.msra.mxu0 0.0
  %408 = vmatpush.msra.mxu0 0.0
  %409 = vmatpush.msra.mxu0 0.0
  %410 = vmatpush.msra.mxu0 0.0
  %411 = vmatpush.msra.mxu0 0.0
  %412 = vmatpush.msra.mxu0 0.0
  %413 = vmatpush.msra.mxu0 0.0
  %414 = vmatpush.msra.mxu0 %v357
  %415 = vmatpush.msra.mxu0 %v338
  %416 = vmatmul.f32.gmra.mxu0 %v52
  %v417 = vpop.f32.mrf.mxu0
  %v418 = vadd.f32 0.0, %v417
  %419 = vmatmul.f32.gmra.mxu0 %v55
  %v420 = vpop.f32.mrf.mxu0
  %v421 = vadd.f32 0.0, %v420
  %422 = vdwg.mxu0
  %423 = vmatpush.msra.mxu0 0.0
  %424 = vmatpush.msra.mxu0 0.0
  %425 = vmatpush.msra.mxu0 0.0
  %426 = vmatpush.msra.mxu0 0.0
  %427 = vmatpush.msra.mxu0 0.0
  %428 = vmatpush.msra.mxu0 0.0
  %429 = vmatpush.msra.mxu0 0.0
  %430 = vmatpush.msra.mxu0 0.0
  %431 = vmatpush.msra.mxu0 0.0
  %432 = vmatpush.msra.mxu0 0.0
  %433 = vmatpush.msra.mxu0 0.0
  %434 = vmatpush.msra.mxu0 0.0
  %435 = vmatpush.msra.mxu0 0.0
  %436 = vmatpush.msra.mxu0 0.0
  %437 = vmatpush.msra.mxu0 %v360
  %438 = vmatpush.msra.mxu0 %v339
  %439 = vmatmul.f32.gmra.mxu0 %v52
  %v440 = vpop.f32.mrf.mxu0
  %v441 = vadd.f32 0.0, %v440
  %442 = vmatmul.f32.gmra.mxu0 %v55
  %v443 = vpop.f32.mrf.mxu0
  %v444 = vadd.f32 0.0, %v443
  %445 = vdwg.mxu0
  %446 = vmatpush.msra.mxu0 0.0
  %447 = vmatpush.msra.mxu0 0.0
  %448 = vmatpush.msra.mxu0 0.0
  %449 = vmatpush.msra.mxu0 0.0
  %450 = vmatpush.msra.mxu0 0.0
  %451 = vmatpush.msra.mxu0 0.0
  %452 = vmatpush.msra.mxu0 0.0
  %453 = vmatpush.msra.mxu0 0.0
  %454 = vmatpush.msra.mxu0 0.0
  %455 = vmatpush.msra.mxu0 0.0
  %456 = vmatpush.msra.mxu0 0.0
  %457 = vmatpush.msra.mxu0 0.0
  %458 = vmatpush.msra.mxu0 0.0
  %459 = vmatpush.msra.mxu0 0.0
  %460 = vmatpush.msra.mxu0 %v363
  %461 = vmatpush.msra.mxu0 %v340
  %462 = vmatmul.f32.gmra.mxu0 %v52
  %v463 = vpop.f32.mrf.mxu0
  %v464 = vadd.f32 0.0, %v463
  %465 = vmatmul.f32.gmra.mxu0 %v55
  %v466 = vpop.f32.mrf.mxu0
  %v467 = vadd.f32 0.0, %v466
  %468 = vdwg.mxu0
  %469 = vmatpush.msra.mxu0 0.0
  %470 = vmatpush.msra.mxu0 0.0
  %471 = vmatpush.msra.mxu0 0.0
  %472 = vmatpush.msra.mxu0 0.0
  %473 = vmatpush.msra.mxu0 0.0
  %474 = vmatpush.msra.mxu0 0.0
  %475 = vmatpush.msra.mxu0 0.0
  %476 = vmatpush.msra.mxu0 0.0
  %477 = vmatpush.msra.mxu0 0.0
  %478 = vmatpush.msra.mxu0 0.0
  %479 = vmatpush.msra.mxu0 0.0
  %480 = vmatpush.msra.mxu0 0.0
  %481 = vmatpush.msra.mxu0 0.0
  %482 = vmatpush.msra.mxu0 0.0
  %483 = vmatpush.msra.mxu0 %v366
  %484 = vmatpush.msra.mxu0 %v341
  %485 = vmatmul.f32.gmra.mxu0 %v52
  %v486 = vpop.f32.mrf.mxu0
  %v487 = vadd.f32 0.0, %v486
  %488 = vmatmul.f32.gmra.mxu0 %v55
  %v489 = vpop.f32.mrf.mxu0
  %v490 = vadd.f32 0.0, %v489
  %491 = vdwg.mxu0
  %492 = vmatpush.msra.mxu0 0.0
  %493 = vmatpush.msra.mxu0 0.0
  %494 = vmatpush.msra.mxu0 0.0
  %495 = vmatpush.msra.mxu0 0.0
  %496 = vmatpush.msra.mxu0 0.0
  %497 = vmatpush.msra.mxu0 0.0
  %498 = vmatpush.msra.mxu0 0.0
  %499 = vmatpush.msra.mxu0 0.0
  %500 = vmatpush.msra.mxu0 0.0
  %501 = vmatpush.msra.mxu0 0.0
  %502 = vmatpush.msra.mxu0 0.0
  %503 = vmatpush.msra.mxu0 0.0
  %504 = vmatpush.msra.mxu0 0.0
  %505 = vmatpush.msra.mxu0 0.0
  %506 = vmatpush.msra.mxu0 %v369
  %507 = vmatpush.msra.mxu0 %v342
  %508 = vmatmul.f32.gmra.mxu0 %v52
  %v509 = vpop.f32.mrf.mxu0
  %v510 = vadd.f32 0.0, %v509
  %511 = vmatmul.f32.gmra.mxu0 %v55
  %v512 = vpop.f32.mrf.mxu0
  %v513 = vadd.f32 0.0, %v512
  %514 = vdwg.mxu0
  %515 = vmatpush.msra.mxu0 0.0
  %516 = vmatpush.msra.mxu0 0.0
  %517 = vmatpush.msra.mxu0 0.0
  %518 = vmatpush.msra.mxu0 0.0
  %519 = vmatpush.msra.mxu0 0.0
  %520 = vmatpush.msra.mxu0 0.0
  %521 = vmatpush.msra.mxu0 0.0
  %522 = vmatpush.msra.mxu0 0.0
  %523 = vmatpush.msra.mxu0 0.0
  %524 = vmatpush.msra.mxu0 0.0
  %525 = vmatpush.msra.mxu0 0.0
  %526 = vmatpush.msra.mxu0 0.0
  %527 = vmatpush.msra.mxu0 0.0
  %528 = vmatpush.msra.mxu0 0.0
  %529 = vmatpush.msra.mxu0 %v372
  %530 = vmatpush.msra.mxu0 %v343
  %531 = vmatmul.f32.gmra.mxu0 %v52
  %v532 = vpop.f32.mrf.mxu0
  %v533 = vadd.f32 0.0, %v532
  %534 = vmatmul.f32.gmra.mxu0 %v55
  %v535 = vpop.f32.mrf.mxu0
  %v536 = vadd.f32 0.0, %v535
  %537 = vdwg.mxu0
  %538 = vmatpush.msra.mxu0 0.0
  %539 = vmatpush.msra.mxu0 0.0
  %540 = vmatpush.msra.mxu0 0.0
  %541 = vmatpush.msra.mxu0 0.0
  %542 = vmatpush.msra.mxu0 0.0
  %543 = vmatpush.msra.mxu0 0.0
  %544 = vmatpush.msra.mxu0 0.0
  %545 = vmatpush.msra.mxu0 0.0
  %546 = vmatpush.msra.mxu0 0.0
  %547 = vmatpush.msra.mxu0 0.0
  %548 = vmatpush.msra.mxu0 0.0
  %549 = vmatpush.msra.mxu0 0.0
  %550 = vmatpush.msra.mxu0 0.0
  %551 = vmatpush.msra.mxu0 0.0
  %552 = vmatpush.msra.mxu0 %v375
  %553 = vmatpush.msra.mxu0 %v344
  %554 = vmatmul.f32.gmra.mxu0 %v52
  %v555 = vpop.f32.mrf.mxu0
  %v556 = vadd.f32 0.0, %v555
  %557 = vmatmul.f32.gmra.mxu0 %v55
  %v558 = vpop.f32.mrf.mxu0
  %v559 = vadd.f32 0.0, %v558
  %560 = vdwg.mxu0
  %v561 = vmax.f32 %v395, %v441
  %v562 = vmax.f32 %v418, %v464
  %v563 = vmax.f32 %v398, %v444
  %v564 = vmax.f32 %v421, %v467
  %v565 = vmax.f32 %v487, %v533
  %v566 = vmax.f32 %v510, %v556
  %v567 = vmax.f32 %v490, %v536
  %v568 = vmax.f32 %v513, %v559
  %v569 = vmax.f32 %v561, %v565
  %v570 = vmax.f32 %v562, %v566
  %v571 = vmax.f32 %v563, %v567
  %v572 = vmax.f32 %v564, %v568
  %v573 = vadd.f32 %v569, %v281
  %v574 = vadd.f32 %v570, %v281
  %v575 = vadd.f32 %v571, %v286
  %v576 = vadd.f32 %v572, %v286
  %v577 = vmax.f32 %v573, 0.0
  %v578 = vmax.f32 %v574, 0.0
  %v579 = vmax.f32 %v575, 0.0
  %v580 = vmax.f32 %v576, 0.0
  %v581 = vmul.f32 %v577, %v24
  %v582 = vmul.f32 %v578, %v25
  %v583 = vmul.f32 %v579, %v26
  %v584 = vmul.f32 %v580, %v27
  %v585 = vadd.f32 %v581, %v582
  %v586 = vadd.f32 %v585, %v583
  %v587 = vadd.f32 %v586, %v584
  %588 = vadd.xlane.f32.xlu0 %v587
  %v589 = vpop.xlane.xlu0 %588
  %v590 = vrot.slane %v589, 4
  %v591 = vadd.f32 %v589, %v590
  %v592 = vrot.slane %v591, 2
  %v593 = vadd.f32 %v591, %v592
  %v594 = vrot.slane %v593, 1
  %v595 = vadd.f32 %v593, %v594
  %s596 = vtos %v595
  %v597 = vstv %s596
  %v598 = vmul.f32 %v577, %v29
  %v599 = vmul.f32 %v578, %v30
  %v600 = vmul.f32 %v579, %v31
  %v601 = vmul.f32 %v580, %v32
  %v602 = vadd.f32 %v598, %v599
  %v603 = vadd.f32 %v602, %v600
  %v604 = vadd.f32 %v603, %v601
  %605 = vadd.xlane.f32.xlu0 %v604
  %v606 = vpop.xlane.xlu0 %605
  %v607 = vrot.slane %v606, 4
  %v608 = vadd.f32 %v606, %v607
  %v609 = vrot.slane %v608, 2
  %v610 = vadd.f32 %v608, %v609
  %v611 = vrot.slane %v610, 1
  %v612 = vadd.f32 %v610, %v611
  %s613 = vtos %v612
  %v614 = vstv %s613
  %v615 = vsel %vm330, %v597, %v614
  %v616 = vadd.f32 %v615, %v33
  %v617 = vperm.slane %v616, 0
  %s618 = scalar_lea.vmem %s5, 8
  %619 = vst.msk [vmem:[%s618] sm:$0xff] %vm334, %v617
  %s620 = scalar_lea.vmem %s0, 256
  %v621 = vld [vmem:[%s620] sm:$0xff]
  %v622 = vld [vmem:[%s620 + $0x8] sm:$0xff]
  %v623 = vld [vmem:[%s620 + $0x10] sm:$0xff]
  %v624 = vld [vmem:[%s620 + $0x18] sm:$0xff]
  %v625 = vld [vmem:[%s620 + $0x20] sm:$0xff]
  %v626 = vld [vmem:[%s620 + $0x28] sm:$0xff]
  %v627 = vld [vmem:[%s620 + $0x30] sm:$0xff]
  %v628 = vld [vmem:[%s620 + $0x38] sm:$0xff]
  %v629 = vld [vmem:[%s620 + $0x40] sm:$0x1]
  %v630 = vld [vmem:[%s620 + $0x48] sm:$0x1]
  %v631 = vld [vmem:[%s620 + $0x50] sm:$0x1]
  %v632 = vld [vmem:[%s620 + $0x58] sm:$0x1]
  %v633 = vld [vmem:[%s620 + $0x60] sm:$0x1]
  %v634 = vld [vmem:[%s620 + $0x68] sm:$0x1]
  %v635 = vld [vmem:[%s620 + $0x70] sm:$0x1]
  %v636 = vld [vmem:[%s620 + $0x78] sm:$0x1]
  %v638 = vsel %vm57, %v629, 0
  %v641 = vsel %vm57, %v630, 0
  %v644 = vsel %vm57, %v631, 0
  %v647 = vsel %vm57, %v632, 0
  %v650 = vsel %vm57, %v633, 0
  %v653 = vsel %vm57, %v634, 0
  %v656 = vsel %vm57, %v635, 0
  %v659 = vsel %vm57, %v636, 0
  %661 = vmatpush.msra.mxu0 0.0
  %662 = vmatpush.msra.mxu0 0.0
  %663 = vmatpush.msra.mxu0 0.0
  %664 = vmatpush.msra.mxu0 0.0
  %665 = vmatpush.msra.mxu0 0.0
  %666 = vmatpush.msra.mxu0 0.0
  %667 = vmatpush.msra.mxu0 0.0
  %668 = vmatpush.msra.mxu0 0.0
  %669 = vmatpush.msra.mxu0 0.0
  %670 = vmatpush.msra.mxu0 0.0
  %671 = vmatpush.msra.mxu0 0.0
  %672 = vmatpush.msra.mxu0 0.0
  %673 = vmatpush.msra.mxu0 0.0
  %674 = vmatpush.msra.mxu0 0.0
  %675 = vmatpush.msra.mxu0 %v638
  %676 = vmatpush.msra.mxu0 %v621
  %677 = vmatmul.f32.gmra.mxu0 %v52
  %v678 = vpop.f32.mrf.mxu0
  %v679 = vadd.f32 0.0, %v678
  %680 = vmatmul.f32.gmra.mxu0 %v55
  %v681 = vpop.f32.mrf.mxu0
  %v682 = vadd.f32 0.0, %v681
  %683 = vdwg.mxu0
  %684 = vmatpush.msra.mxu0 0.0
  %685 = vmatpush.msra.mxu0 0.0
  %686 = vmatpush.msra.mxu0 0.0
  %687 = vmatpush.msra.mxu0 0.0
  %688 = vmatpush.msra.mxu0 0.0
  %689 = vmatpush.msra.mxu0 0.0
  %690 = vmatpush.msra.mxu0 0.0
  %691 = vmatpush.msra.mxu0 0.0
  %692 = vmatpush.msra.mxu0 0.0
  %693 = vmatpush.msra.mxu0 0.0
  %694 = vmatpush.msra.mxu0 0.0
  %695 = vmatpush.msra.mxu0 0.0
  %696 = vmatpush.msra.mxu0 0.0
  %697 = vmatpush.msra.mxu0 0.0
  %698 = vmatpush.msra.mxu0 %v641
  %699 = vmatpush.msra.mxu0 %v622
  %700 = vmatmul.f32.gmra.mxu0 %v52
  %v701 = vpop.f32.mrf.mxu0
  %v702 = vadd.f32 0.0, %v701
  %703 = vmatmul.f32.gmra.mxu0 %v55
  %v704 = vpop.f32.mrf.mxu0
  %v705 = vadd.f32 0.0, %v704
  %706 = vdwg.mxu0
  %707 = vmatpush.msra.mxu0 0.0
  %708 = vmatpush.msra.mxu0 0.0
  %709 = vmatpush.msra.mxu0 0.0
  %710 = vmatpush.msra.mxu0 0.0
  %711 = vmatpush.msra.mxu0 0.0
  %712 = vmatpush.msra.mxu0 0.0
  %713 = vmatpush.msra.mxu0 0.0
  %714 = vmatpush.msra.mxu0 0.0
  %715 = vmatpush.msra.mxu0 0.0
  %716 = vmatpush.msra.mxu0 0.0
  %717 = vmatpush.msra.mxu0 0.0
  %718 = vmatpush.msra.mxu0 0.0
  %719 = vmatpush.msra.mxu0 0.0
  %720 = vmatpush.msra.mxu0 0.0
  %721 = vmatpush.msra.mxu0 %v644
  %722 = vmatpush.msra.mxu0 %v623
  %723 = vmatmul.f32.gmra.mxu0 %v52
  %v724 = vpop.f32.mrf.mxu0
  %v725 = vadd.f32 0.0, %v724
  %726 = vmatmul.f32.gmra.mxu0 %v55
  %v727 = vpop.f32.mrf.mxu0
  %v728 = vadd.f32 0.0, %v727
  %729 = vdwg.mxu0
  %730 = vmatpush.msra.mxu0 0.0
  %731 = vmatpush.msra.mxu0 0.0
  %732 = vmatpush.msra.mxu0 0.0
  %733 = vmatpush.msra.mxu0 0.0
  %734 = vmatpush.msra.mxu0 0.0
  %735 = vmatpush.msra.mxu0 0.0
  %736 = vmatpush.msra.mxu0 0.0
  %737 = vmatpush.msra.mxu0 0.0
  %738 = vmatpush.msra.mxu0 0.0
  %739 = vmatpush.msra.mxu0 0.0
  %740 = vmatpush.msra.mxu0 0.0
  %741 = vmatpush.msra.mxu0 0.0
  %742 = vmatpush.msra.mxu0 0.0
  %743 = vmatpush.msra.mxu0 0.0
  %744 = vmatpush.msra.mxu0 %v647
  %745 = vmatpush.msra.mxu0 %v624
  %746 = vmatmul.f32.gmra.mxu0 %v52
  %v747 = vpop.f32.mrf.mxu0
  %v748 = vadd.f32 0.0, %v747
  %749 = vmatmul.f32.gmra.mxu0 %v55
  %v750 = vpop.f32.mrf.mxu0
  %v751 = vadd.f32 0.0, %v750
  %752 = vdwg.mxu0
  %753 = vmatpush.msra.mxu0 0.0
  %754 = vmatpush.msra.mxu0 0.0
  %755 = vmatpush.msra.mxu0 0.0
  %756 = vmatpush.msra.mxu0 0.0
  %757 = vmatpush.msra.mxu0 0.0
  %758 = vmatpush.msra.mxu0 0.0
  %759 = vmatpush.msra.mxu0 0.0
  %760 = vmatpush.msra.mxu0 0.0
  %761 = vmatpush.msra.mxu0 0.0
  %762 = vmatpush.msra.mxu0 0.0
  %763 = vmatpush.msra.mxu0 0.0
  %764 = vmatpush.msra.mxu0 0.0
  %765 = vmatpush.msra.mxu0 0.0
  %766 = vmatpush.msra.mxu0 0.0
  %767 = vmatpush.msra.mxu0 %v650
  %768 = vmatpush.msra.mxu0 %v625
  %769 = vmatmul.f32.gmra.mxu0 %v52
  %v770 = vpop.f32.mrf.mxu0
  %v771 = vadd.f32 0.0, %v770
  %772 = vmatmul.f32.gmra.mxu0 %v55
  %v773 = vpop.f32.mrf.mxu0
  %v774 = vadd.f32 0.0, %v773
  %775 = vdwg.mxu0
  %776 = vmatpush.msra.mxu0 0.0
  %777 = vmatpush.msra.mxu0 0.0
  %778 = vmatpush.msra.mxu0 0.0
  %779 = vmatpush.msra.mxu0 0.0
  %780 = vmatpush.msra.mxu0 0.0
  %781 = vmatpush.msra.mxu0 0.0
  %782 = vmatpush.msra.mxu0 0.0
  %783 = vmatpush.msra.mxu0 0.0
  %784 = vmatpush.msra.mxu0 0.0
  %785 = vmatpush.msra.mxu0 0.0
  %786 = vmatpush.msra.mxu0 0.0
  %787 = vmatpush.msra.mxu0 0.0
  %788 = vmatpush.msra.mxu0 0.0
  %789 = vmatpush.msra.mxu0 0.0
  %790 = vmatpush.msra.mxu0 %v653
  %791 = vmatpush.msra.mxu0 %v626
  %792 = vmatmul.f32.gmra.mxu0 %v52
  %v793 = vpop.f32.mrf.mxu0
  %v794 = vadd.f32 0.0, %v793
  %795 = vmatmul.f32.gmra.mxu0 %v55
  %v796 = vpop.f32.mrf.mxu0
  %v797 = vadd.f32 0.0, %v796
  %798 = vdwg.mxu0
  %799 = vmatpush.msra.mxu0 0.0
  %800 = vmatpush.msra.mxu0 0.0
  %801 = vmatpush.msra.mxu0 0.0
  %802 = vmatpush.msra.mxu0 0.0
  %803 = vmatpush.msra.mxu0 0.0
  %804 = vmatpush.msra.mxu0 0.0
  %805 = vmatpush.msra.mxu0 0.0
  %806 = vmatpush.msra.mxu0 0.0
  %807 = vmatpush.msra.mxu0 0.0
  %808 = vmatpush.msra.mxu0 0.0
  %809 = vmatpush.msra.mxu0 0.0
  %810 = vmatpush.msra.mxu0 0.0
  %811 = vmatpush.msra.mxu0 0.0
  %812 = vmatpush.msra.mxu0 0.0
  %813 = vmatpush.msra.mxu0 %v656
  %814 = vmatpush.msra.mxu0 %v627
  %815 = vmatmul.f32.gmra.mxu0 %v52
  %v816 = vpop.f32.mrf.mxu0
  %v817 = vadd.f32 0.0, %v816
  %818 = vmatmul.f32.gmra.mxu0 %v55
  %v819 = vpop.f32.mrf.mxu0
  %v820 = vadd.f32 0.0, %v819
  %821 = vdwg.mxu0
  %822 = vmatpush.msra.mxu0 0.0
  %823 = vmatpush.msra.mxu0 0.0
  %824 = vmatpush.msra.mxu0 0.0
  %825 = vmatpush.msra.mxu0 0.0
  %826 = vmatpush.msra.mxu0 0.0
  %827 = vmatpush.msra.mxu0 0.0
  %828 = vmatpush.msra.mxu0 0.0
  %829 = vmatpush.msra.mxu0 0.0
  %830 = vmatpush.msra.mxu0 0.0
  %831 = vmatpush.msra.mxu0 0.0
  %832 = vmatpush.msra.mxu0 0.0
  %833 = vmatpush.msra.mxu0 0.0
  %834 = vmatpush.msra.mxu0 0.0
  %835 = vmatpush.msra.mxu0 0.0
  %836 = vmatpush.msra.mxu0 %v659
  %837 = vmatpush.msra.mxu0 %v628
  %838 = vmatmul.f32.gmra.mxu0 %v52
  %v839 = vpop.f32.mrf.mxu0
  %v840 = vadd.f32 0.0, %v839
  %841 = vmatmul.f32.gmra.mxu0 %v55
  %v842 = vpop.f32.mrf.mxu0
  %v843 = vadd.f32 0.0, %v842
  %844 = vdwg.mxu0
  %v845 = vmax.f32 %v679, %v725
  %v846 = vmax.f32 %v702, %v748
  %v847 = vmax.f32 %v682, %v728
  %v848 = vmax.f32 %v705, %v751
  %v849 = vmax.f32 %v771, %v817
  %v850 = vmax.f32 %v794, %v840
  %v851 = vmax.f32 %v774, %v820
  %v852 = vmax.f32 %v797, %v843
  %v853 = vmax.f32 %v845, %v849
  %v854 = vmax.f32 %v846, %v850
  %v855 = vmax.f32 %v847, %v851
  %v856 = vmax.f32 %v848, %v852
  %v857 = vadd.f32 %v853, %v281
  %v858 = vadd.f32 %v854, %v281
  %v859 = vadd.f32 %v855, %v286
  %v860 = vadd.f32 %v856, %v286
  %v861 = vmax.f32 %v857, 0.0
  %v862 = vmax.f32 %v858, 0.0
  %v863 = vmax.f32 %v859, 0.0
  %v864 = vmax.f32 %v860, 0.0
  %v865 = vmul.f32 %v861, %v24
  %v866 = vmul.f32 %v862, %v25
  %v867 = vmul.f32 %v863, %v26
  %v868 = vmul.f32 %v864, %v27
  %v869 = vadd.f32 %v865, %v866
  %v870 = vadd.f32 %v869, %v867
  %v871 = vadd.f32 %v870, %v868
  %872 = vadd.xlane.f32.xlu0 %v871
  %v873 = vpop.xlane.xlu0 %872
  %v874 = vrot.slane %v873, 4
  %v875 = vadd.f32 %v873, %v874
  %v876 = vrot.slane %v875, 2
  %v877 = vadd.f32 %v875, %v876
  %v878 = vrot.slane %v877, 1
  %v879 = vadd.f32 %v877, %v878
  %s880 = vtos %v879
  %v881 = vstv %s880
  %v882 = vmul.f32 %v861, %v29
  %v883 = vmul.f32 %v862, %v30
  %v884 = vmul.f32 %v863, %v31
  %v885 = vmul.f32 %v864, %v32
  %v886 = vadd.f32 %v882, %v883
  %v887 = vadd.f32 %v886, %v884
  %v888 = vadd.f32 %v887, %v885
  %889 = vadd.xlane.f32.xlu0 %v888
  %v890 = vpop.xlane.xlu0 %889
  %v891 = vrot.slane %v890, 4
  %v892 = vadd.f32 %v890, %v891
  %v893 = vrot.slane %v892, 2
  %v894 = vadd.f32 %v892, %v893
  %v895 = vrot.slane %v894, 1
  %v896 = vadd.f32 %v894, %v895
  %s897 = vtos %v896
  %v898 = vstv %s897
  %v899 = vsel %vm330, %v881, %v898
  %v900 = vadd.f32 %v899, %v33
  %v901 = vperm.slane %v900, 0
  %s902 = scalar_lea.vmem %s5, 16
  %903 = vst.msk [vmem:[%s902] sm:$0xff] %vm334, %v901
  %s904 = scalar_lea.vmem %s0, 384
  %v905 = vld [vmem:[%s904] sm:$0xff]
  %v906 = vld [vmem:[%s904 + $0x8] sm:$0xff]
  %v907 = vld [vmem:[%s904 + $0x10] sm:$0xff]
  %v908 = vld [vmem:[%s904 + $0x18] sm:$0xff]
  %v909 = vld [vmem:[%s904 + $0x20] sm:$0xff]
  %v910 = vld [vmem:[%s904 + $0x28] sm:$0xff]
  %v911 = vld [vmem:[%s904 + $0x30] sm:$0xff]
  %v912 = vld [vmem:[%s904 + $0x38] sm:$0xff]
  %v913 = vld [vmem:[%s904 + $0x40] sm:$0x1]
  %v914 = vld [vmem:[%s904 + $0x48] sm:$0x1]
  %v915 = vld [vmem:[%s904 + $0x50] sm:$0x1]
  %v916 = vld [vmem:[%s904 + $0x58] sm:$0x1]
  %v917 = vld [vmem:[%s904 + $0x60] sm:$0x1]
  %v918 = vld [vmem:[%s904 + $0x68] sm:$0x1]
  %v919 = vld [vmem:[%s904 + $0x70] sm:$0x1]
  %v920 = vld [vmem:[%s904 + $0x78] sm:$0x1]
  %v922 = vsel %vm57, %v913, 0
  %v925 = vsel %vm57, %v914, 0
  %v928 = vsel %vm57, %v915, 0
  %v931 = vsel %vm57, %v916, 0
  %v934 = vsel %vm57, %v917, 0
  %v937 = vsel %vm57, %v918, 0
  %v940 = vsel %vm57, %v919, 0
  %v943 = vsel %vm57, %v920, 0
  %945 = vmatpush.msra.mxu0 0.0
  %946 = vmatpush.msra.mxu0 0.0
  %947 = vmatpush.msra.mxu0 0.0
  %948 = vmatpush.msra.mxu0 0.0
  %949 = vmatpush.msra.mxu0 0.0
  %950 = vmatpush.msra.mxu0 0.0
  %951 = vmatpush.msra.mxu0 0.0
  %952 = vmatpush.msra.mxu0 0.0
  %953 = vmatpush.msra.mxu0 0.0
  %954 = vmatpush.msra.mxu0 0.0
  %955 = vmatpush.msra.mxu0 0.0
  %956 = vmatpush.msra.mxu0 0.0
  %957 = vmatpush.msra.mxu0 0.0
  %958 = vmatpush.msra.mxu0 0.0
  %959 = vmatpush.msra.mxu0 %v922
  %960 = vmatpush.msra.mxu0 %v905
  %961 = vmatmul.f32.gmra.mxu0 %v52
  %v962 = vpop.f32.mrf.mxu0
  %v963 = vadd.f32 0.0, %v962
  %964 = vmatmul.f32.gmra.mxu0 %v55
  %v965 = vpop.f32.mrf.mxu0
  %v966 = vadd.f32 0.0, %v965
  %967 = vdwg.mxu0
  %968 = vmatpush.msra.mxu0 0.0
  %969 = vmatpush.msra.mxu0 0.0
  %970 = vmatpush.msra.mxu0 0.0
  %971 = vmatpush.msra.mxu0 0.0
  %972 = vmatpush.msra.mxu0 0.0
  %973 = vmatpush.msra.mxu0 0.0
  %974 = vmatpush.msra.mxu0 0.0
  %975 = vmatpush.msra.mxu0 0.0
  %976 = vmatpush.msra.mxu0 0.0
  %977 = vmatpush.msra.mxu0 0.0
  %978 = vmatpush.msra.mxu0 0.0
  %979 = vmatpush.msra.mxu0 0.0
  %980 = vmatpush.msra.mxu0 0.0
  %981 = vmatpush.msra.mxu0 0.0
  %982 = vmatpush.msra.mxu0 %v925
  %983 = vmatpush.msra.mxu0 %v906
  %984 = vmatmul.f32.gmra.mxu0 %v52
  %v985 = vpop.f32.mrf.mxu0
  %v986 = vadd.f32 0.0, %v985
  %987 = vmatmul.f32.gmra.mxu0 %v55
  %v988 = vpop.f32.mrf.mxu0
  %v989 = vadd.f32 0.0, %v988
  %990 = vdwg.mxu0
  %991 = vmatpush.msra.mxu0 0.0
  %992 = vmatpush.msra.mxu0 0.0
  %993 = vmatpush.msra.mxu0 0.0
  %994 = vmatpush.msra.mxu0 0.0
  %995 = vmatpush.msra.mxu0 0.0
  %996 = vmatpush.msra.mxu0 0.0
  %997 = vmatpush.msra.mxu0 0.0
  %998 = vmatpush.msra.mxu0 0.0
  %999 = vmatpush.msra.mxu0 0.0
  %1000 = vmatpush.msra.mxu0 0.0
  %1001 = vmatpush.msra.mxu0 0.0
  %1002 = vmatpush.msra.mxu0 0.0
  %1003 = vmatpush.msra.mxu0 0.0
  %1004 = vmatpush.msra.mxu0 0.0
  %1005 = vmatpush.msra.mxu0 %v928
  %1006 = vmatpush.msra.mxu0 %v907
  %1007 = vmatmul.f32.gmra.mxu0 %v52
  %v1008 = vpop.f32.mrf.mxu0
  %v1009 = vadd.f32 0.0, %v1008
  %1010 = vmatmul.f32.gmra.mxu0 %v55
  %v1011 = vpop.f32.mrf.mxu0
  %v1012 = vadd.f32 0.0, %v1011
  %1013 = vdwg.mxu0
  %1014 = vmatpush.msra.mxu0 0.0
  %1015 = vmatpush.msra.mxu0 0.0
  %1016 = vmatpush.msra.mxu0 0.0
  %1017 = vmatpush.msra.mxu0 0.0
  %1018 = vmatpush.msra.mxu0 0.0
  %1019 = vmatpush.msra.mxu0 0.0
  %1020 = vmatpush.msra.mxu0 0.0
  %1021 = vmatpush.msra.mxu0 0.0
  %1022 = vmatpush.msra.mxu0 0.0
  %1023 = vmatpush.msra.mxu0 0.0
  %1024 = vmatpush.msra.mxu0 0.0
  %1025 = vmatpush.msra.mxu0 0.0
  %1026 = vmatpush.msra.mxu0 0.0
  %1027 = vmatpush.msra.mxu0 0.0
  %1028 = vmatpush.msra.mxu0 %v931
  %1029 = vmatpush.msra.mxu0 %v908
  %1030 = vmatmul.f32.gmra.mxu0 %v52
  %v1031 = vpop.f32.mrf.mxu0
  %v1032 = vadd.f32 0.0, %v1031
  %1033 = vmatmul.f32.gmra.mxu0 %v55
  %v1034 = vpop.f32.mrf.mxu0
  %v1035 = vadd.f32 0.0, %v1034
  %1036 = vdwg.mxu0
  %1037 = vmatpush.msra.mxu0 0.0
  %1038 = vmatpush.msra.mxu0 0.0
  %1039 = vmatpush.msra.mxu0 0.0
  %1040 = vmatpush.msra.mxu0 0.0
  %1041 = vmatpush.msra.mxu0 0.0
  %1042 = vmatpush.msra.mxu0 0.0
  %1043 = vmatpush.msra.mxu0 0.0
  %1044 = vmatpush.msra.mxu0 0.0
  %1045 = vmatpush.msra.mxu0 0.0
  %1046 = vmatpush.msra.mxu0 0.0
  %1047 = vmatpush.msra.mxu0 0.0
  %1048 = vmatpush.msra.mxu0 0.0
  %1049 = vmatpush.msra.mxu0 0.0
  %1050 = vmatpush.msra.mxu0 0.0
  %1051 = vmatpush.msra.mxu0 %v934
  %1052 = vmatpush.msra.mxu0 %v909
  %1053 = vmatmul.f32.gmra.mxu0 %v52
  %v1054 = vpop.f32.mrf.mxu0
  %v1055 = vadd.f32 0.0, %v1054
  %1056 = vmatmul.f32.gmra.mxu0 %v55
  %v1057 = vpop.f32.mrf.mxu0
  %v1058 = vadd.f32 0.0, %v1057
  %1059 = vdwg.mxu0
  %1060 = vmatpush.msra.mxu0 0.0
  %1061 = vmatpush.msra.mxu0 0.0
  %1062 = vmatpush.msra.mxu0 0.0
  %1063 = vmatpush.msra.mxu0 0.0
  %1064 = vmatpush.msra.mxu0 0.0
  %1065 = vmatpush.msra.mxu0 0.0
  %1066 = vmatpush.msra.mxu0 0.0
  %1067 = vmatpush.msra.mxu0 0.0
  %1068 = vmatpush.msra.mxu0 0.0
  %1069 = vmatpush.msra.mxu0 0.0
  %1070 = vmatpush.msra.mxu0 0.0
  %1071 = vmatpush.msra.mxu0 0.0
  %1072 = vmatpush.msra.mxu0 0.0
  %1073 = vmatpush.msra.mxu0 0.0
  %1074 = vmatpush.msra.mxu0 %v937
  %1075 = vmatpush.msra.mxu0 %v910
  %1076 = vmatmul.f32.gmra.mxu0 %v52
  %v1077 = vpop.f32.mrf.mxu0
  %v1078 = vadd.f32 0.0, %v1077
  %1079 = vmatmul.f32.gmra.mxu0 %v55
  %v1080 = vpop.f32.mrf.mxu0
  %v1081 = vadd.f32 0.0, %v1080
  %1082 = vdwg.mxu0
  %1083 = vmatpush.msra.mxu0 0.0
  %1084 = vmatpush.msra.mxu0 0.0
  %1085 = vmatpush.msra.mxu0 0.0
  %1086 = vmatpush.msra.mxu0 0.0
  %1087 = vmatpush.msra.mxu0 0.0
  %1088 = vmatpush.msra.mxu0 0.0
  %1089 = vmatpush.msra.mxu0 0.0
  %1090 = vmatpush.msra.mxu0 0.0
  %1091 = vmatpush.msra.mxu0 0.0
  %1092 = vmatpush.msra.mxu0 0.0
  %1093 = vmatpush.msra.mxu0 0.0
  %1094 = vmatpush.msra.mxu0 0.0
  %1095 = vmatpush.msra.mxu0 0.0
  %1096 = vmatpush.msra.mxu0 0.0
  %1097 = vmatpush.msra.mxu0 %v940
  %1098 = vmatpush.msra.mxu0 %v911
  %1099 = vmatmul.f32.gmra.mxu0 %v52
  %v1100 = vpop.f32.mrf.mxu0
  %v1101 = vadd.f32 0.0, %v1100
  %1102 = vmatmul.f32.gmra.mxu0 %v55
  %v1103 = vpop.f32.mrf.mxu0
  %v1104 = vadd.f32 0.0, %v1103
  %1105 = vdwg.mxu0
  %1106 = vmatpush.msra.mxu0 0.0
  %1107 = vmatpush.msra.mxu0 0.0
  %1108 = vmatpush.msra.mxu0 0.0
  %1109 = vmatpush.msra.mxu0 0.0
  %1110 = vmatpush.msra.mxu0 0.0
  %1111 = vmatpush.msra.mxu0 0.0
  %1112 = vmatpush.msra.mxu0 0.0
  %1113 = vmatpush.msra.mxu0 0.0
  %1114 = vmatpush.msra.mxu0 0.0
  %1115 = vmatpush.msra.mxu0 0.0
  %1116 = vmatpush.msra.mxu0 0.0
  %1117 = vmatpush.msra.mxu0 0.0
  %1118 = vmatpush.msra.mxu0 0.0
  %1119 = vmatpush.msra.mxu0 0.0
  %1120 = vmatpush.msra.mxu0 %v943
  %1121 = vmatpush.msra.mxu0 %v912
  %1122 = vmatmul.f32.gmra.mxu0 %v52
  %v1123 = vpop.f32.mrf.mxu0
  %v1124 = vadd.f32 0.0, %v1123
  %1125 = vmatmul.f32.gmra.mxu0 %v55
  %v1126 = vpop.f32.mrf.mxu0
  %v1127 = vadd.f32 0.0, %v1126
  %1128 = vdwg.mxu0
  %v1129 = vmax.f32 %v963, %v1009
  %v1130 = vmax.f32 %v986, %v1032
  %v1131 = vmax.f32 %v966, %v1012
  %v1132 = vmax.f32 %v989, %v1035
  %v1133 = vmax.f32 %v1055, %v1101
  %v1134 = vmax.f32 %v1078, %v1124
  %v1135 = vmax.f32 %v1058, %v1104
  %v1136 = vmax.f32 %v1081, %v1127
  %v1137 = vmax.f32 %v1129, %v1133
  %v1138 = vmax.f32 %v1130, %v1134
  %v1139 = vmax.f32 %v1131, %v1135
  %v1140 = vmax.f32 %v1132, %v1136
  %v1141 = vadd.f32 %v1137, %v281
  %v1142 = vadd.f32 %v1138, %v281
  %v1143 = vadd.f32 %v1139, %v286
  %v1144 = vadd.f32 %v1140, %v286
  %v1145 = vmax.f32 %v1141, 0.0
  %v1146 = vmax.f32 %v1142, 0.0
  %v1147 = vmax.f32 %v1143, 0.0
  %v1148 = vmax.f32 %v1144, 0.0
  %v1149 = vmul.f32 %v1145, %v24
  %v1150 = vmul.f32 %v1146, %v25
  %v1151 = vmul.f32 %v1147, %v26
  %v1152 = vmul.f32 %v1148, %v27
  %v1153 = vadd.f32 %v1149, %v1150
  %v1154 = vadd.f32 %v1153, %v1151
  %v1155 = vadd.f32 %v1154, %v1152
  %1156 = vadd.xlane.f32.xlu0 %v1155
  %v1157 = vpop.xlane.xlu0 %1156
  %v1158 = vrot.slane %v1157, 4
  %v1159 = vadd.f32 %v1157, %v1158
  %v1160 = vrot.slane %v1159, 2
  %v1161 = vadd.f32 %v1159, %v1160
  %v1162 = vrot.slane %v1161, 1
  %v1163 = vadd.f32 %v1161, %v1162
  %s1164 = vtos %v1163
  %v1165 = vstv %s1164
  %v1166 = vmul.f32 %v1145, %v29
  %v1167 = vmul.f32 %v1146, %v30
  %v1168 = vmul.f32 %v1147, %v31
  %v1169 = vmul.f32 %v1148, %v32
  %v1170 = vadd.f32 %v1166, %v1167
  %v1171 = vadd.f32 %v1170, %v1168
  %v1172 = vadd.f32 %v1171, %v1169
  %1173 = vadd.xlane.f32.xlu0 %v1172
  %v1174 = vpop.xlane.xlu0 %1173
  %v1175 = vrot.slane %v1174, 4
  %v1176 = vadd.f32 %v1174, %v1175
  %v1177 = vrot.slane %v1176, 2
  %v1178 = vadd.f32 %v1176, %v1177
  %v1179 = vrot.slane %v1178, 1
  %v1180 = vadd.f32 %v1178, %v1179
  %s1181 = vtos %v1180
  %v1182 = vstv %s1181
  %v1183 = vsel %vm330, %v1165, %v1182
  %v1184 = vadd.f32 %v1183, %v33
  %v1185 = vperm.slane %v1184, 0
  %s1186 = scalar_lea.vmem %s5, 24
  %1187 = vst.msk [vmem:[%s1186] sm:$0xff] %vm334, %v1185
  %s1188 = scalar_lea.vmem %s0, 512
  %v1189 = vld [vmem:[%s1188] sm:$0xff]
  %v1190 = vld [vmem:[%s1188 + $0x8] sm:$0xff]
  %v1191 = vld [vmem:[%s1188 + $0x10] sm:$0xff]
  %v1192 = vld [vmem:[%s1188 + $0x18] sm:$0xff]
  %v1193 = vld [vmem:[%s1188 + $0x20] sm:$0xff]
  %v1194 = vld [vmem:[%s1188 + $0x28] sm:$0xff]
  %v1195 = vld [vmem:[%s1188 + $0x30] sm:$0xff]
  %v1196 = vld [vmem:[%s1188 + $0x38] sm:$0xff]
  %v1197 = vld [vmem:[%s1188 + $0x40] sm:$0x1]
  %v1198 = vld [vmem:[%s1188 + $0x48] sm:$0x1]
  %v1199 = vld [vmem:[%s1188 + $0x50] sm:$0x1]
  %v1200 = vld [vmem:[%s1188 + $0x58] sm:$0x1]
  %v1201 = vld [vmem:[%s1188 + $0x60] sm:$0x1]
  %v1202 = vld [vmem:[%s1188 + $0x68] sm:$0x1]
  %v1203 = vld [vmem:[%s1188 + $0x70] sm:$0x1]
  %v1204 = vld [vmem:[%s1188 + $0x78] sm:$0x1]
  %v1206 = vsel %vm57, %v1197, 0
  %v1209 = vsel %vm57, %v1198, 0
  %v1212 = vsel %vm57, %v1199, 0
  %v1215 = vsel %vm57, %v1200, 0
  %v1218 = vsel %vm57, %v1201, 0
  %v1221 = vsel %vm57, %v1202, 0
  %v1224 = vsel %vm57, %v1203, 0
  %v1227 = vsel %vm57, %v1204, 0
  %1229 = vmatpush.msra.mxu0 0.0
  %1230 = vmatpush.msra.mxu0 0.0
  %1231 = vmatpush.msra.mxu0 0.0
  %1232 = vmatpush.msra.mxu0 0.0
  %1233 = vmatpush.msra.mxu0 0.0
  %1234 = vmatpush.msra.mxu0 0.0
  %1235 = vmatpush.msra.mxu0 0.0
  %1236 = vmatpush.msra.mxu0 0.0
  %1237 = vmatpush.msra.mxu0 0.0
  %1238 = vmatpush.msra.mxu0 0.0
  %1239 = vmatpush.msra.mxu0 0.0
  %1240 = vmatpush.msra.mxu0 0.0
  %1241 = vmatpush.msra.mxu0 0.0
  %1242 = vmatpush.msra.mxu0 0.0
  %1243 = vmatpush.msra.mxu0 %v1206
  %1244 = vmatpush.msra.mxu0 %v1189
  %1245 = vmatmul.f32.gmra.mxu0 %v52
  %v1246 = vpop.f32.mrf.mxu0
  %v1247 = vadd.f32 0.0, %v1246
  %1248 = vmatmul.f32.gmra.mxu0 %v55
  %v1249 = vpop.f32.mrf.mxu0
  %v1250 = vadd.f32 0.0, %v1249
  %1251 = vdwg.mxu0
  %1252 = vmatpush.msra.mxu0 0.0
  %1253 = vmatpush.msra.mxu0 0.0
  %1254 = vmatpush.msra.mxu0 0.0
  %1255 = vmatpush.msra.mxu0 0.0
  %1256 = vmatpush.msra.mxu0 0.0
  %1257 = vmatpush.msra.mxu0 0.0
  %1258 = vmatpush.msra.mxu0 0.0
  %1259 = vmatpush.msra.mxu0 0.0
  %1260 = vmatpush.msra.mxu0 0.0
  %1261 = vmatpush.msra.mxu0 0.0
  %1262 = vmatpush.msra.mxu0 0.0
  %1263 = vmatpush.msra.mxu0 0.0
  %1264 = vmatpush.msra.mxu0 0.0
  %1265 = vmatpush.msra.mxu0 0.0
  %1266 = vmatpush.msra.mxu0 %v1209
  %1267 = vmatpush.msra.mxu0 %v1190
  %1268 = vmatmul.f32.gmra.mxu0 %v52
  %v1269 = vpop.f32.mrf.mxu0
  %v1270 = vadd.f32 0.0, %v1269
  %1271 = vmatmul.f32.gmra.mxu0 %v55
  %v1272 = vpop.f32.mrf.mxu0
  %v1273 = vadd.f32 0.0, %v1272
  %1274 = vdwg.mxu0
  %1275 = vmatpush.msra.mxu0 0.0
  %1276 = vmatpush.msra.mxu0 0.0
  %1277 = vmatpush.msra.mxu0 0.0
  %1278 = vmatpush.msra.mxu0 0.0
  %1279 = vmatpush.msra.mxu0 0.0
  %1280 = vmatpush.msra.mxu0 0.0
  %1281 = vmatpush.msra.mxu0 0.0
  %1282 = vmatpush.msra.mxu0 0.0
  %1283 = vmatpush.msra.mxu0 0.0
  %1284 = vmatpush.msra.mxu0 0.0
  %1285 = vmatpush.msra.mxu0 0.0
  %1286 = vmatpush.msra.mxu0 0.0
  %1287 = vmatpush.msra.mxu0 0.0
  %1288 = vmatpush.msra.mxu0 0.0
  %1289 = vmatpush.msra.mxu0 %v1212
  %1290 = vmatpush.msra.mxu0 %v1191
  %1291 = vmatmul.f32.gmra.mxu0 %v52
  %v1292 = vpop.f32.mrf.mxu0
  %v1293 = vadd.f32 0.0, %v1292
  %1294 = vmatmul.f32.gmra.mxu0 %v55
  %v1295 = vpop.f32.mrf.mxu0
  %v1296 = vadd.f32 0.0, %v1295
  %1297 = vdwg.mxu0
  %1298 = vmatpush.msra.mxu0 0.0
  %1299 = vmatpush.msra.mxu0 0.0
  %1300 = vmatpush.msra.mxu0 0.0
  %1301 = vmatpush.msra.mxu0 0.0
  %1302 = vmatpush.msra.mxu0 0.0
  %1303 = vmatpush.msra.mxu0 0.0
  %1304 = vmatpush.msra.mxu0 0.0
  %1305 = vmatpush.msra.mxu0 0.0
  %1306 = vmatpush.msra.mxu0 0.0
  %1307 = vmatpush.msra.mxu0 0.0
  %1308 = vmatpush.msra.mxu0 0.0
  %1309 = vmatpush.msra.mxu0 0.0
  %1310 = vmatpush.msra.mxu0 0.0
  %1311 = vmatpush.msra.mxu0 0.0
  %1312 = vmatpush.msra.mxu0 %v1215
  %1313 = vmatpush.msra.mxu0 %v1192
  %1314 = vmatmul.f32.gmra.mxu0 %v52
  %v1315 = vpop.f32.mrf.mxu0
  %v1316 = vadd.f32 0.0, %v1315
  %1317 = vmatmul.f32.gmra.mxu0 %v55
  %v1318 = vpop.f32.mrf.mxu0
  %v1319 = vadd.f32 0.0, %v1318
  %1320 = vdwg.mxu0
  %1321 = vmatpush.msra.mxu0 0.0
  %1322 = vmatpush.msra.mxu0 0.0
  %1323 = vmatpush.msra.mxu0 0.0
  %1324 = vmatpush.msra.mxu0 0.0
  %1325 = vmatpush.msra.mxu0 0.0
  %1326 = vmatpush.msra.mxu0 0.0
  %1327 = vmatpush.msra.mxu0 0.0
  %1328 = vmatpush.msra.mxu0 0.0
  %1329 = vmatpush.msra.mxu0 0.0
  %1330 = vmatpush.msra.mxu0 0.0
  %1331 = vmatpush.msra.mxu0 0.0
  %1332 = vmatpush.msra.mxu0 0.0
  %1333 = vmatpush.msra.mxu0 0.0
  %1334 = vmatpush.msra.mxu0 0.0
  %1335 = vmatpush.msra.mxu0 %v1218
  %1336 = vmatpush.msra.mxu0 %v1193
  %1337 = vmatmul.f32.gmra.mxu0 %v52
  %v1338 = vpop.f32.mrf.mxu0
  %v1339 = vadd.f32 0.0, %v1338
  %1340 = vmatmul.f32.gmra.mxu0 %v55
  %v1341 = vpop.f32.mrf.mxu0
  %v1342 = vadd.f32 0.0, %v1341
  %1343 = vdwg.mxu0
  %1344 = vmatpush.msra.mxu0 0.0
  %1345 = vmatpush.msra.mxu0 0.0
  %1346 = vmatpush.msra.mxu0 0.0
  %1347 = vmatpush.msra.mxu0 0.0
  %1348 = vmatpush.msra.mxu0 0.0
  %1349 = vmatpush.msra.mxu0 0.0
  %1350 = vmatpush.msra.mxu0 0.0
  %1351 = vmatpush.msra.mxu0 0.0
  %1352 = vmatpush.msra.mxu0 0.0
  %1353 = vmatpush.msra.mxu0 0.0
  %1354 = vmatpush.msra.mxu0 0.0
  %1355 = vmatpush.msra.mxu0 0.0
  %1356 = vmatpush.msra.mxu0 0.0
  %1357 = vmatpush.msra.mxu0 0.0
  %1358 = vmatpush.msra.mxu0 %v1221
  %1359 = vmatpush.msra.mxu0 %v1194
  %1360 = vmatmul.f32.gmra.mxu0 %v52
  %v1361 = vpop.f32.mrf.mxu0
  %v1362 = vadd.f32 0.0, %v1361
  %1363 = vmatmul.f32.gmra.mxu0 %v55
  %v1364 = vpop.f32.mrf.mxu0
  %v1365 = vadd.f32 0.0, %v1364
  %1366 = vdwg.mxu0
  %1367 = vmatpush.msra.mxu0 0.0
  %1368 = vmatpush.msra.mxu0 0.0
  %1369 = vmatpush.msra.mxu0 0.0
  %1370 = vmatpush.msra.mxu0 0.0
  %1371 = vmatpush.msra.mxu0 0.0
  %1372 = vmatpush.msra.mxu0 0.0
  %1373 = vmatpush.msra.mxu0 0.0
  %1374 = vmatpush.msra.mxu0 0.0
  %1375 = vmatpush.msra.mxu0 0.0
  %1376 = vmatpush.msra.mxu0 0.0
  %1377 = vmatpush.msra.mxu0 0.0
  %1378 = vmatpush.msra.mxu0 0.0
  %1379 = vmatpush.msra.mxu0 0.0
  %1380 = vmatpush.msra.mxu0 0.0
  %1381 = vmatpush.msra.mxu0 %v1224
  %1382 = vmatpush.msra.mxu0 %v1195
  %1383 = vmatmul.f32.gmra.mxu0 %v52
  %v1384 = vpop.f32.mrf.mxu0
  %v1385 = vadd.f32 0.0, %v1384
  %1386 = vmatmul.f32.gmra.mxu0 %v55
  %v1387 = vpop.f32.mrf.mxu0
  %v1388 = vadd.f32 0.0, %v1387
  %1389 = vdwg.mxu0
  %1390 = vmatpush.msra.mxu0 0.0
  %1391 = vmatpush.msra.mxu0 0.0
  %1392 = vmatpush.msra.mxu0 0.0
  %1393 = vmatpush.msra.mxu0 0.0
  %1394 = vmatpush.msra.mxu0 0.0
  %1395 = vmatpush.msra.mxu0 0.0
  %1396 = vmatpush.msra.mxu0 0.0
  %1397 = vmatpush.msra.mxu0 0.0
  %1398 = vmatpush.msra.mxu0 0.0
  %1399 = vmatpush.msra.mxu0 0.0
  %1400 = vmatpush.msra.mxu0 0.0
  %1401 = vmatpush.msra.mxu0 0.0
  %1402 = vmatpush.msra.mxu0 0.0
  %1403 = vmatpush.msra.mxu0 0.0
  %1404 = vmatpush.msra.mxu0 %v1227
  %1405 = vmatpush.msra.mxu0 %v1196
  %1406 = vmatmul.f32.gmra.mxu0 %v52
  %v1407 = vpop.f32.mrf.mxu0
  %v1408 = vadd.f32 0.0, %v1407
  %1409 = vmatmul.f32.gmra.mxu0 %v55
  %v1410 = vpop.f32.mrf.mxu0
  %v1411 = vadd.f32 0.0, %v1410
  %1412 = vdwg.mxu0
  %v1413 = vmax.f32 %v1247, %v1293
  %v1414 = vmax.f32 %v1270, %v1316
  %v1415 = vmax.f32 %v1250, %v1296
  %v1416 = vmax.f32 %v1273, %v1319
  %v1417 = vmax.f32 %v1339, %v1385
  %v1418 = vmax.f32 %v1362, %v1408
  %v1419 = vmax.f32 %v1342, %v1388
  %v1420 = vmax.f32 %v1365, %v1411
  %v1421 = vmax.f32 %v1413, %v1417
  %v1422 = vmax.f32 %v1414, %v1418
  %v1423 = vmax.f32 %v1415, %v1419
  %v1424 = vmax.f32 %v1416, %v1420
  %v1425 = vadd.f32 %v1421, %v281
  %v1426 = vadd.f32 %v1422, %v281
  %v1427 = vadd.f32 %v1423, %v286
  %v1428 = vadd.f32 %v1424, %v286
  %v1429 = vmax.f32 %v1425, 0.0
  %v1430 = vmax.f32 %v1426, 0.0
  %v1431 = vmax.f32 %v1427, 0.0
  %v1432 = vmax.f32 %v1428, 0.0
  %v1433 = vmul.f32 %v1429, %v24
  %v1434 = vmul.f32 %v1430, %v25
  %v1435 = vmul.f32 %v1431, %v26
  %v1436 = vmul.f32 %v1432, %v27
  %v1437 = vadd.f32 %v1433, %v1434
  %v1438 = vadd.f32 %v1437, %v1435
  %v1439 = vadd.f32 %v1438, %v1436
  %1440 = vadd.xlane.f32.xlu0 %v1439
  %v1441 = vpop.xlane.xlu0 %1440
  %v1442 = vrot.slane %v1441, 4
  %v1443 = vadd.f32 %v1441, %v1442
  %v1444 = vrot.slane %v1443, 2
  %v1445 = vadd.f32 %v1443, %v1444
  %v1446 = vrot.slane %v1445, 1
  %v1447 = vadd.f32 %v1445, %v1446
  %s1448 = vtos %v1447
  %v1449 = vstv %s1448
  %v1450 = vmul.f32 %v1429, %v29
  %v1451 = vmul.f32 %v1430, %v30
  %v1452 = vmul.f32 %v1431, %v31
  %v1453 = vmul.f32 %v1432, %v32
  %v1454 = vadd.f32 %v1450, %v1451
  %v1455 = vadd.f32 %v1454, %v1452
  %v1456 = vadd.f32 %v1455, %v1453
  %1457 = vadd.xlane.f32.xlu0 %v1456
  %v1458 = vpop.xlane.xlu0 %1457
  %v1459 = vrot.slane %v1458, 4
  %v1460 = vadd.f32 %v1458, %v1459
  %v1461 = vrot.slane %v1460, 2
  %v1462 = vadd.f32 %v1460, %v1461
  %v1463 = vrot.slane %v1462, 1
  %v1464 = vadd.f32 %v1462, %v1463
  %s1465 = vtos %v1464
  %v1466 = vstv %s1465
  %v1467 = vsel %vm330, %v1449, %v1466
  %v1468 = vadd.f32 %v1467, %v33
  %v1469 = vperm.slane %v1468, 0
  %s1470 = scalar_lea.vmem %s5, 32
  %1471 = vst.msk [vmem:[%s1470] sm:$0xff] %vm334, %v1469
  %s1472 = scalar_lea.vmem %s0, 640
  %v1473 = vld [vmem:[%s1472] sm:$0xff]
  %v1474 = vld [vmem:[%s1472 + $0x8] sm:$0xff]
  %v1475 = vld [vmem:[%s1472 + $0x10] sm:$0xff]
  %v1476 = vld [vmem:[%s1472 + $0x18] sm:$0xff]
  %v1477 = vld [vmem:[%s1472 + $0x20] sm:$0xff]
  %v1478 = vld [vmem:[%s1472 + $0x28] sm:$0xff]
  %v1479 = vld [vmem:[%s1472 + $0x30] sm:$0xff]
  %v1480 = vld [vmem:[%s1472 + $0x38] sm:$0xff]
  %v1481 = vld [vmem:[%s1472 + $0x40] sm:$0x1]
  %v1482 = vld [vmem:[%s1472 + $0x48] sm:$0x1]
  %v1483 = vld [vmem:[%s1472 + $0x50] sm:$0x1]
  %v1484 = vld [vmem:[%s1472 + $0x58] sm:$0x1]
  %v1485 = vld [vmem:[%s1472 + $0x60] sm:$0x1]
  %v1486 = vld [vmem:[%s1472 + $0x68] sm:$0x1]
  %v1487 = vld [vmem:[%s1472 + $0x70] sm:$0x1]
  %v1488 = vld [vmem:[%s1472 + $0x78] sm:$0x1]
  %v1490 = vsel %vm57, %v1481, 0
  %v1493 = vsel %vm57, %v1482, 0
  %v1496 = vsel %vm57, %v1483, 0
  %v1499 = vsel %vm57, %v1484, 0
  %v1502 = vsel %vm57, %v1485, 0
  %v1505 = vsel %vm57, %v1486, 0
  %v1508 = vsel %vm57, %v1487, 0
  %v1511 = vsel %vm57, %v1488, 0
  %1513 = vmatpush.msra.mxu0 0.0
  %1514 = vmatpush.msra.mxu0 0.0
  %1515 = vmatpush.msra.mxu0 0.0
  %1516 = vmatpush.msra.mxu0 0.0
  %1517 = vmatpush.msra.mxu0 0.0
  %1518 = vmatpush.msra.mxu0 0.0
  %1519 = vmatpush.msra.mxu0 0.0
  %1520 = vmatpush.msra.mxu0 0.0
  %1521 = vmatpush.msra.mxu0 0.0
  %1522 = vmatpush.msra.mxu0 0.0
  %1523 = vmatpush.msra.mxu0 0.0
  %1524 = vmatpush.msra.mxu0 0.0
  %1525 = vmatpush.msra.mxu0 0.0
  %1526 = vmatpush.msra.mxu0 0.0
  %1527 = vmatpush.msra.mxu0 %v1490
  %1528 = vmatpush.msra.mxu0 %v1473
  %1529 = vmatmul.f32.gmra.mxu0 %v52
  %v1530 = vpop.f32.mrf.mxu0
  %v1531 = vadd.f32 0.0, %v1530
  %1532 = vmatmul.f32.gmra.mxu0 %v55
  %v1533 = vpop.f32.mrf.mxu0
  %v1534 = vadd.f32 0.0, %v1533
  %1535 = vdwg.mxu0
  %1536 = vmatpush.msra.mxu0 0.0
  %1537 = vmatpush.msra.mxu0 0.0
  %1538 = vmatpush.msra.mxu0 0.0
  %1539 = vmatpush.msra.mxu0 0.0
  %1540 = vmatpush.msra.mxu0 0.0
  %1541 = vmatpush.msra.mxu0 0.0
  %1542 = vmatpush.msra.mxu0 0.0
  %1543 = vmatpush.msra.mxu0 0.0
  %1544 = vmatpush.msra.mxu0 0.0
  %1545 = vmatpush.msra.mxu0 0.0
  %1546 = vmatpush.msra.mxu0 0.0
  %1547 = vmatpush.msra.mxu0 0.0
  %1548 = vmatpush.msra.mxu0 0.0
  %1549 = vmatpush.msra.mxu0 0.0
  %1550 = vmatpush.msra.mxu0 %v1493
  %1551 = vmatpush.msra.mxu0 %v1474
  %1552 = vmatmul.f32.gmra.mxu0 %v52
  %v1553 = vpop.f32.mrf.mxu0
  %v1554 = vadd.f32 0.0, %v1553
  %1555 = vmatmul.f32.gmra.mxu0 %v55
  %v1556 = vpop.f32.mrf.mxu0
  %v1557 = vadd.f32 0.0, %v1556
  %1558 = vdwg.mxu0
  %1559 = vmatpush.msra.mxu0 0.0
  %1560 = vmatpush.msra.mxu0 0.0
  %1561 = vmatpush.msra.mxu0 0.0
  %1562 = vmatpush.msra.mxu0 0.0
  %1563 = vmatpush.msra.mxu0 0.0
  %1564 = vmatpush.msra.mxu0 0.0
  %1565 = vmatpush.msra.mxu0 0.0
  %1566 = vmatpush.msra.mxu0 0.0
  %1567 = vmatpush.msra.mxu0 0.0
  %1568 = vmatpush.msra.mxu0 0.0
  %1569 = vmatpush.msra.mxu0 0.0
  %1570 = vmatpush.msra.mxu0 0.0
  %1571 = vmatpush.msra.mxu0 0.0
  %1572 = vmatpush.msra.mxu0 0.0
  %1573 = vmatpush.msra.mxu0 %v1496
  %1574 = vmatpush.msra.mxu0 %v1475
  %1575 = vmatmul.f32.gmra.mxu0 %v52
  %v1576 = vpop.f32.mrf.mxu0
  %v1577 = vadd.f32 0.0, %v1576
  %1578 = vmatmul.f32.gmra.mxu0 %v55
  %v1579 = vpop.f32.mrf.mxu0
  %v1580 = vadd.f32 0.0, %v1579
  %1581 = vdwg.mxu0
  %1582 = vmatpush.msra.mxu0 0.0
  %1583 = vmatpush.msra.mxu0 0.0
  %1584 = vmatpush.msra.mxu0 0.0
  %1585 = vmatpush.msra.mxu0 0.0
  %1586 = vmatpush.msra.mxu0 0.0
  %1587 = vmatpush.msra.mxu0 0.0
  %1588 = vmatpush.msra.mxu0 0.0
  %1589 = vmatpush.msra.mxu0 0.0
  %1590 = vmatpush.msra.mxu0 0.0
  %1591 = vmatpush.msra.mxu0 0.0
  %1592 = vmatpush.msra.mxu0 0.0
  %1593 = vmatpush.msra.mxu0 0.0
  %1594 = vmatpush.msra.mxu0 0.0
  %1595 = vmatpush.msra.mxu0 0.0
  %1596 = vmatpush.msra.mxu0 %v1499
  %1597 = vmatpush.msra.mxu0 %v1476
  %1598 = vmatmul.f32.gmra.mxu0 %v52
  %v1599 = vpop.f32.mrf.mxu0
  %v1600 = vadd.f32 0.0, %v1599
  %1601 = vmatmul.f32.gmra.mxu0 %v55
  %v1602 = vpop.f32.mrf.mxu0
  %v1603 = vadd.f32 0.0, %v1602
  %1604 = vdwg.mxu0
  %1605 = vmatpush.msra.mxu0 0.0
  %1606 = vmatpush.msra.mxu0 0.0
  %1607 = vmatpush.msra.mxu0 0.0
  %1608 = vmatpush.msra.mxu0 0.0
  %1609 = vmatpush.msra.mxu0 0.0
  %1610 = vmatpush.msra.mxu0 0.0
  %1611 = vmatpush.msra.mxu0 0.0
  %1612 = vmatpush.msra.mxu0 0.0
  %1613 = vmatpush.msra.mxu0 0.0
  %1614 = vmatpush.msra.mxu0 0.0
  %1615 = vmatpush.msra.mxu0 0.0
  %1616 = vmatpush.msra.mxu0 0.0
  %1617 = vmatpush.msra.mxu0 0.0
  %1618 = vmatpush.msra.mxu0 0.0
  %1619 = vmatpush.msra.mxu0 %v1502
  %1620 = vmatpush.msra.mxu0 %v1477
  %1621 = vmatmul.f32.gmra.mxu0 %v52
  %v1622 = vpop.f32.mrf.mxu0
  %v1623 = vadd.f32 0.0, %v1622
  %1624 = vmatmul.f32.gmra.mxu0 %v55
  %v1625 = vpop.f32.mrf.mxu0
  %v1626 = vadd.f32 0.0, %v1625
  %1627 = vdwg.mxu0
  %1628 = vmatpush.msra.mxu0 0.0
  %1629 = vmatpush.msra.mxu0 0.0
  %1630 = vmatpush.msra.mxu0 0.0
  %1631 = vmatpush.msra.mxu0 0.0
  %1632 = vmatpush.msra.mxu0 0.0
  %1633 = vmatpush.msra.mxu0 0.0
  %1634 = vmatpush.msra.mxu0 0.0
  %1635 = vmatpush.msra.mxu0 0.0
  %1636 = vmatpush.msra.mxu0 0.0
  %1637 = vmatpush.msra.mxu0 0.0
  %1638 = vmatpush.msra.mxu0 0.0
  %1639 = vmatpush.msra.mxu0 0.0
  %1640 = vmatpush.msra.mxu0 0.0
  %1641 = vmatpush.msra.mxu0 0.0
  %1642 = vmatpush.msra.mxu0 %v1505
  %1643 = vmatpush.msra.mxu0 %v1478
  %1644 = vmatmul.f32.gmra.mxu0 %v52
  %v1645 = vpop.f32.mrf.mxu0
  %v1646 = vadd.f32 0.0, %v1645
  %1647 = vmatmul.f32.gmra.mxu0 %v55
  %v1648 = vpop.f32.mrf.mxu0
  %v1649 = vadd.f32 0.0, %v1648
  %1650 = vdwg.mxu0
  %1651 = vmatpush.msra.mxu0 0.0
  %1652 = vmatpush.msra.mxu0 0.0
  %1653 = vmatpush.msra.mxu0 0.0
  %1654 = vmatpush.msra.mxu0 0.0
  %1655 = vmatpush.msra.mxu0 0.0
  %1656 = vmatpush.msra.mxu0 0.0
  %1657 = vmatpush.msra.mxu0 0.0
  %1658 = vmatpush.msra.mxu0 0.0
  %1659 = vmatpush.msra.mxu0 0.0
  %1660 = vmatpush.msra.mxu0 0.0
  %1661 = vmatpush.msra.mxu0 0.0
  %1662 = vmatpush.msra.mxu0 0.0
  %1663 = vmatpush.msra.mxu0 0.0
  %1664 = vmatpush.msra.mxu0 0.0
  %1665 = vmatpush.msra.mxu0 %v1508
  %1666 = vmatpush.msra.mxu0 %v1479
  %1667 = vmatmul.f32.gmra.mxu0 %v52
  %v1668 = vpop.f32.mrf.mxu0
  %v1669 = vadd.f32 0.0, %v1668
  %1670 = vmatmul.f32.gmra.mxu0 %v55
  %v1671 = vpop.f32.mrf.mxu0
  %v1672 = vadd.f32 0.0, %v1671
  %1673 = vdwg.mxu0
  %1674 = vmatpush.msra.mxu0 0.0
  %1675 = vmatpush.msra.mxu0 0.0
  %1676 = vmatpush.msra.mxu0 0.0
  %1677 = vmatpush.msra.mxu0 0.0
  %1678 = vmatpush.msra.mxu0 0.0
  %1679 = vmatpush.msra.mxu0 0.0
  %1680 = vmatpush.msra.mxu0 0.0
  %1681 = vmatpush.msra.mxu0 0.0
  %1682 = vmatpush.msra.mxu0 0.0
  %1683 = vmatpush.msra.mxu0 0.0
  %1684 = vmatpush.msra.mxu0 0.0
  %1685 = vmatpush.msra.mxu0 0.0
  %1686 = vmatpush.msra.mxu0 0.0
  %1687 = vmatpush.msra.mxu0 0.0
  %1688 = vmatpush.msra.mxu0 %v1511
  %1689 = vmatpush.msra.mxu0 %v1480
  %1690 = vmatmul.f32.gmra.mxu0 %v52
  %v1691 = vpop.f32.mrf.mxu0
  %v1692 = vadd.f32 0.0, %v1691
  %1693 = vmatmul.f32.gmra.mxu0 %v55
  %v1694 = vpop.f32.mrf.mxu0
  %v1695 = vadd.f32 0.0, %v1694
  %1696 = vdwg.mxu0
  %v1697 = vmax.f32 %v1531, %v1577
  %v1698 = vmax.f32 %v1554, %v1600
  %v1699 = vmax.f32 %v1534, %v1580
  %v1700 = vmax.f32 %v1557, %v1603
  %v1701 = vmax.f32 %v1623, %v1669
  %v1702 = vmax.f32 %v1646, %v1692
  %v1703 = vmax.f32 %v1626, %v1672
  %v1704 = vmax.f32 %v1649, %v1695
  %v1705 = vmax.f32 %v1697, %v1701
  %v1706 = vmax.f32 %v1698, %v1702
  %v1707 = vmax.f32 %v1699, %v1703
  %v1708 = vmax.f32 %v1700, %v1704
  %v1709 = vadd.f32 %v1705, %v281
  %v1710 = vadd.f32 %v1706, %v281
  %v1711 = vadd.f32 %v1707, %v286
  %v1712 = vadd.f32 %v1708, %v286
  %v1713 = vmax.f32 %v1709, 0.0
  %v1714 = vmax.f32 %v1710, 0.0
  %v1715 = vmax.f32 %v1711, 0.0
  %v1716 = vmax.f32 %v1712, 0.0
  %v1717 = vmul.f32 %v1713, %v24
  %v1718 = vmul.f32 %v1714, %v25
  %v1719 = vmul.f32 %v1715, %v26
  %v1720 = vmul.f32 %v1716, %v27
  %v1721 = vadd.f32 %v1717, %v1718
  %v1722 = vadd.f32 %v1721, %v1719
  %v1723 = vadd.f32 %v1722, %v1720
  %1724 = vadd.xlane.f32.xlu0 %v1723
  %v1725 = vpop.xlane.xlu0 %1724
  %v1726 = vrot.slane %v1725, 4
  %v1727 = vadd.f32 %v1725, %v1726
  %v1728 = vrot.slane %v1727, 2
  %v1729 = vadd.f32 %v1727, %v1728
  %v1730 = vrot.slane %v1729, 1
  %v1731 = vadd.f32 %v1729, %v1730
  %s1732 = vtos %v1731
  %v1733 = vstv %s1732
  %v1734 = vmul.f32 %v1713, %v29
  %v1735 = vmul.f32 %v1714, %v30
  %v1736 = vmul.f32 %v1715, %v31
  %v1737 = vmul.f32 %v1716, %v32
  %v1738 = vadd.f32 %v1734, %v1735
  %v1739 = vadd.f32 %v1738, %v1736
  %v1740 = vadd.f32 %v1739, %v1737
  %1741 = vadd.xlane.f32.xlu0 %v1740
  %v1742 = vpop.xlane.xlu0 %1741
  %v1743 = vrot.slane %v1742, 4
  %v1744 = vadd.f32 %v1742, %v1743
  %v1745 = vrot.slane %v1744, 2
  %v1746 = vadd.f32 %v1744, %v1745
  %v1747 = vrot.slane %v1746, 1
  %v1748 = vadd.f32 %v1746, %v1747
  %s1749 = vtos %v1748
  %v1750 = vstv %s1749
  %v1751 = vsel %vm330, %v1733, %v1750
  %v1752 = vadd.f32 %v1751, %v33
  %v1753 = vperm.slane %v1752, 0
  %s1754 = scalar_lea.vmem %s5, 40
  %1755 = vst.msk [vmem:[%s1754] sm:$0xff] %vm334, %v1753
  %s1756 = scalar_lea.vmem %s0, 768
  %v1757 = vld [vmem:[%s1756] sm:$0xff]
  %v1758 = vld [vmem:[%s1756 + $0x8] sm:$0xff]
  %v1759 = vld [vmem:[%s1756 + $0x10] sm:$0xff]
  %v1760 = vld [vmem:[%s1756 + $0x18] sm:$0xff]
  %v1761 = vld [vmem:[%s1756 + $0x20] sm:$0xff]
  %v1762 = vld [vmem:[%s1756 + $0x28] sm:$0xff]
  %v1763 = vld [vmem:[%s1756 + $0x30] sm:$0xff]
  %v1764 = vld [vmem:[%s1756 + $0x38] sm:$0xff]
  %v1765 = vld [vmem:[%s1756 + $0x40] sm:$0x1]
  %v1766 = vld [vmem:[%s1756 + $0x48] sm:$0x1]
  %v1767 = vld [vmem:[%s1756 + $0x50] sm:$0x1]
  %v1768 = vld [vmem:[%s1756 + $0x58] sm:$0x1]
  %v1769 = vld [vmem:[%s1756 + $0x60] sm:$0x1]
  %v1770 = vld [vmem:[%s1756 + $0x68] sm:$0x1]
  %v1771 = vld [vmem:[%s1756 + $0x70] sm:$0x1]
  %v1772 = vld [vmem:[%s1756 + $0x78] sm:$0x1]
  %v1774 = vsel %vm57, %v1765, 0
  %v1777 = vsel %vm57, %v1766, 0
  %v1780 = vsel %vm57, %v1767, 0
  %v1783 = vsel %vm57, %v1768, 0
  %v1786 = vsel %vm57, %v1769, 0
  %v1789 = vsel %vm57, %v1770, 0
  %v1792 = vsel %vm57, %v1771, 0
  %v1795 = vsel %vm57, %v1772, 0
  %1797 = vmatpush.msra.mxu0 0.0
  %1798 = vmatpush.msra.mxu0 0.0
  %1799 = vmatpush.msra.mxu0 0.0
  %1800 = vmatpush.msra.mxu0 0.0
  %1801 = vmatpush.msra.mxu0 0.0
  %1802 = vmatpush.msra.mxu0 0.0
  %1803 = vmatpush.msra.mxu0 0.0
  %1804 = vmatpush.msra.mxu0 0.0
  %1805 = vmatpush.msra.mxu0 0.0
  %1806 = vmatpush.msra.mxu0 0.0
  %1807 = vmatpush.msra.mxu0 0.0
  %1808 = vmatpush.msra.mxu0 0.0
  %1809 = vmatpush.msra.mxu0 0.0
  %1810 = vmatpush.msra.mxu0 0.0
  %1811 = vmatpush.msra.mxu0 %v1774
  %1812 = vmatpush.msra.mxu0 %v1757
  %1813 = vmatmul.f32.gmra.mxu0 %v52
  %v1814 = vpop.f32.mrf.mxu0
  %v1815 = vadd.f32 0.0, %v1814
  %1816 = vmatmul.f32.gmra.mxu0 %v55
  %v1817 = vpop.f32.mrf.mxu0
  %v1818 = vadd.f32 0.0, %v1817
  %1819 = vdwg.mxu0
  %1820 = vmatpush.msra.mxu0 0.0
  %1821 = vmatpush.msra.mxu0 0.0
  %1822 = vmatpush.msra.mxu0 0.0
  %1823 = vmatpush.msra.mxu0 0.0
  %1824 = vmatpush.msra.mxu0 0.0
  %1825 = vmatpush.msra.mxu0 0.0
  %1826 = vmatpush.msra.mxu0 0.0
  %1827 = vmatpush.msra.mxu0 0.0
  %1828 = vmatpush.msra.mxu0 0.0
  %1829 = vmatpush.msra.mxu0 0.0
  %1830 = vmatpush.msra.mxu0 0.0
  %1831 = vmatpush.msra.mxu0 0.0
  %1832 = vmatpush.msra.mxu0 0.0
  %1833 = vmatpush.msra.mxu0 0.0
  %1834 = vmatpush.msra.mxu0 %v1777
  %1835 = vmatpush.msra.mxu0 %v1758
  %1836 = vmatmul.f32.gmra.mxu0 %v52
  %v1837 = vpop.f32.mrf.mxu0
  %v1838 = vadd.f32 0.0, %v1837
  %1839 = vmatmul.f32.gmra.mxu0 %v55
  %v1840 = vpop.f32.mrf.mxu0
  %v1841 = vadd.f32 0.0, %v1840
  %1842 = vdwg.mxu0
  %1843 = vmatpush.msra.mxu0 0.0
  %1844 = vmatpush.msra.mxu0 0.0
  %1845 = vmatpush.msra.mxu0 0.0
  %1846 = vmatpush.msra.mxu0 0.0
  %1847 = vmatpush.msra.mxu0 0.0
  %1848 = vmatpush.msra.mxu0 0.0
  %1849 = vmatpush.msra.mxu0 0.0
  %1850 = vmatpush.msra.mxu0 0.0
  %1851 = vmatpush.msra.mxu0 0.0
  %1852 = vmatpush.msra.mxu0 0.0
  %1853 = vmatpush.msra.mxu0 0.0
  %1854 = vmatpush.msra.mxu0 0.0
  %1855 = vmatpush.msra.mxu0 0.0
  %1856 = vmatpush.msra.mxu0 0.0
  %1857 = vmatpush.msra.mxu0 %v1780
  %1858 = vmatpush.msra.mxu0 %v1759
  %1859 = vmatmul.f32.gmra.mxu0 %v52
  %v1860 = vpop.f32.mrf.mxu0
  %v1861 = vadd.f32 0.0, %v1860
  %1862 = vmatmul.f32.gmra.mxu0 %v55
  %v1863 = vpop.f32.mrf.mxu0
  %v1864 = vadd.f32 0.0, %v1863
  %1865 = vdwg.mxu0
  %1866 = vmatpush.msra.mxu0 0.0
  %1867 = vmatpush.msra.mxu0 0.0
  %1868 = vmatpush.msra.mxu0 0.0
  %1869 = vmatpush.msra.mxu0 0.0
  %1870 = vmatpush.msra.mxu0 0.0
  %1871 = vmatpush.msra.mxu0 0.0
  %1872 = vmatpush.msra.mxu0 0.0
  %1873 = vmatpush.msra.mxu0 0.0
  %1874 = vmatpush.msra.mxu0 0.0
  %1875 = vmatpush.msra.mxu0 0.0
  %1876 = vmatpush.msra.mxu0 0.0
  %1877 = vmatpush.msra.mxu0 0.0
  %1878 = vmatpush.msra.mxu0 0.0
  %1879 = vmatpush.msra.mxu0 0.0
  %1880 = vmatpush.msra.mxu0 %v1783
  %1881 = vmatpush.msra.mxu0 %v1760
  %1882 = vmatmul.f32.gmra.mxu0 %v52
  %v1883 = vpop.f32.mrf.mxu0
  %v1884 = vadd.f32 0.0, %v1883
  %1885 = vmatmul.f32.gmra.mxu0 %v55
  %v1886 = vpop.f32.mrf.mxu0
  %v1887 = vadd.f32 0.0, %v1886
  %1888 = vdwg.mxu0
  %1889 = vmatpush.msra.mxu0 0.0
  %1890 = vmatpush.msra.mxu0 0.0
  %1891 = vmatpush.msra.mxu0 0.0
  %1892 = vmatpush.msra.mxu0 0.0
  %1893 = vmatpush.msra.mxu0 0.0
  %1894 = vmatpush.msra.mxu0 0.0
  %1895 = vmatpush.msra.mxu0 0.0
  %1896 = vmatpush.msra.mxu0 0.0
  %1897 = vmatpush.msra.mxu0 0.0
  %1898 = vmatpush.msra.mxu0 0.0
  %1899 = vmatpush.msra.mxu0 0.0
  %1900 = vmatpush.msra.mxu0 0.0
  %1901 = vmatpush.msra.mxu0 0.0
  %1902 = vmatpush.msra.mxu0 0.0
  %1903 = vmatpush.msra.mxu0 %v1786
  %1904 = vmatpush.msra.mxu0 %v1761
  %1905 = vmatmul.f32.gmra.mxu0 %v52
  %v1906 = vpop.f32.mrf.mxu0
  %v1907 = vadd.f32 0.0, %v1906
  %1908 = vmatmul.f32.gmra.mxu0 %v55
  %v1909 = vpop.f32.mrf.mxu0
  %v1910 = vadd.f32 0.0, %v1909
  %1911 = vdwg.mxu0
  %1912 = vmatpush.msra.mxu0 0.0
  %1913 = vmatpush.msra.mxu0 0.0
  %1914 = vmatpush.msra.mxu0 0.0
  %1915 = vmatpush.msra.mxu0 0.0
  %1916 = vmatpush.msra.mxu0 0.0
  %1917 = vmatpush.msra.mxu0 0.0
  %1918 = vmatpush.msra.mxu0 0.0
  %1919 = vmatpush.msra.mxu0 0.0
  %1920 = vmatpush.msra.mxu0 0.0
  %1921 = vmatpush.msra.mxu0 0.0
  %1922 = vmatpush.msra.mxu0 0.0
  %1923 = vmatpush.msra.mxu0 0.0
  %1924 = vmatpush.msra.mxu0 0.0
  %1925 = vmatpush.msra.mxu0 0.0
  %1926 = vmatpush.msra.mxu0 %v1789
  %1927 = vmatpush.msra.mxu0 %v1762
  %1928 = vmatmul.f32.gmra.mxu0 %v52
  %v1929 = vpop.f32.mrf.mxu0
  %v1930 = vadd.f32 0.0, %v1929
  %1931 = vmatmul.f32.gmra.mxu0 %v55
  %v1932 = vpop.f32.mrf.mxu0
  %v1933 = vadd.f32 0.0, %v1932
  %1934 = vdwg.mxu0
  %1935 = vmatpush.msra.mxu0 0.0
  %1936 = vmatpush.msra.mxu0 0.0
  %1937 = vmatpush.msra.mxu0 0.0
  %1938 = vmatpush.msra.mxu0 0.0
  %1939 = vmatpush.msra.mxu0 0.0
  %1940 = vmatpush.msra.mxu0 0.0
  %1941 = vmatpush.msra.mxu0 0.0
  %1942 = vmatpush.msra.mxu0 0.0
  %1943 = vmatpush.msra.mxu0 0.0
  %1944 = vmatpush.msra.mxu0 0.0
  %1945 = vmatpush.msra.mxu0 0.0
  %1946 = vmatpush.msra.mxu0 0.0
  %1947 = vmatpush.msra.mxu0 0.0
  %1948 = vmatpush.msra.mxu0 0.0
  %1949 = vmatpush.msra.mxu0 %v1792
  %1950 = vmatpush.msra.mxu0 %v1763
  %1951 = vmatmul.f32.gmra.mxu0 %v52
  %v1952 = vpop.f32.mrf.mxu0
  %v1953 = vadd.f32 0.0, %v1952
  %1954 = vmatmul.f32.gmra.mxu0 %v55
  %v1955 = vpop.f32.mrf.mxu0
  %v1956 = vadd.f32 0.0, %v1955
  %1957 = vdwg.mxu0
  %1958 = vmatpush.msra.mxu0 0.0
  %1959 = vmatpush.msra.mxu0 0.0
  %1960 = vmatpush.msra.mxu0 0.0
  %1961 = vmatpush.msra.mxu0 0.0
  %1962 = vmatpush.msra.mxu0 0.0
  %1963 = vmatpush.msra.mxu0 0.0
  %1964 = vmatpush.msra.mxu0 0.0
  %1965 = vmatpush.msra.mxu0 0.0
  %1966 = vmatpush.msra.mxu0 0.0
  %1967 = vmatpush.msra.mxu0 0.0
  %1968 = vmatpush.msra.mxu0 0.0
  %1969 = vmatpush.msra.mxu0 0.0
  %1970 = vmatpush.msra.mxu0 0.0
  %1971 = vmatpush.msra.mxu0 0.0
  %1972 = vmatpush.msra.mxu0 %v1795
  %1973 = vmatpush.msra.mxu0 %v1764
  %1974 = vmatmul.f32.gmra.mxu0 %v52
  %v1975 = vpop.f32.mrf.mxu0
  %v1976 = vadd.f32 0.0, %v1975
  %1977 = vmatmul.f32.gmra.mxu0 %v55
  %v1978 = vpop.f32.mrf.mxu0
  %v1979 = vadd.f32 0.0, %v1978
  %1980 = vdwg.mxu0
  %v1981 = vmax.f32 %v1815, %v1861
  %v1982 = vmax.f32 %v1838, %v1884
  %v1983 = vmax.f32 %v1818, %v1864
  %v1984 = vmax.f32 %v1841, %v1887
  %v1985 = vmax.f32 %v1907, %v1953
  %v1986 = vmax.f32 %v1930, %v1976
  %v1987 = vmax.f32 %v1910, %v1956
  %v1988 = vmax.f32 %v1933, %v1979
  %v1989 = vmax.f32 %v1981, %v1985
  %v1990 = vmax.f32 %v1982, %v1986
  %v1991 = vmax.f32 %v1983, %v1987
  %v1992 = vmax.f32 %v1984, %v1988
  %v1993 = vadd.f32 %v1989, %v281
  %v1994 = vadd.f32 %v1990, %v281
  %v1995 = vadd.f32 %v1991, %v286
  %v1996 = vadd.f32 %v1992, %v286
  %v1997 = vmax.f32 %v1993, 0.0
  %v1998 = vmax.f32 %v1994, 0.0
  %v1999 = vmax.f32 %v1995, 0.0
  %v2000 = vmax.f32 %v1996, 0.0
  %v2001 = vmul.f32 %v1997, %v24
  %v2002 = vmul.f32 %v1998, %v25
  %v2003 = vmul.f32 %v1999, %v26
  %v2004 = vmul.f32 %v2000, %v27
  %v2005 = vadd.f32 %v2001, %v2002
  %v2006 = vadd.f32 %v2005, %v2003
  %v2007 = vadd.f32 %v2006, %v2004
  %2008 = vadd.xlane.f32.xlu0 %v2007
  %v2009 = vpop.xlane.xlu0 %2008
  %v2010 = vrot.slane %v2009, 4
  %v2011 = vadd.f32 %v2009, %v2010
  %v2012 = vrot.slane %v2011, 2
  %v2013 = vadd.f32 %v2011, %v2012
  %v2014 = vrot.slane %v2013, 1
  %v2015 = vadd.f32 %v2013, %v2014
  %s2016 = vtos %v2015
  %v2017 = vstv %s2016
  %v2018 = vmul.f32 %v1997, %v29
  %v2019 = vmul.f32 %v1998, %v30
  %v2020 = vmul.f32 %v1999, %v31
  %v2021 = vmul.f32 %v2000, %v32
  %v2022 = vadd.f32 %v2018, %v2019
  %v2023 = vadd.f32 %v2022, %v2020
  %v2024 = vadd.f32 %v2023, %v2021
  %2025 = vadd.xlane.f32.xlu0 %v2024
  %v2026 = vpop.xlane.xlu0 %2025
  %v2027 = vrot.slane %v2026, 4
  %v2028 = vadd.f32 %v2026, %v2027
  %v2029 = vrot.slane %v2028, 2
  %v2030 = vadd.f32 %v2028, %v2029
  %v2031 = vrot.slane %v2030, 1
  %v2032 = vadd.f32 %v2030, %v2031
  %s2033 = vtos %v2032
  %v2034 = vstv %s2033
  %v2035 = vsel %vm330, %v2017, %v2034
  %v2036 = vadd.f32 %v2035, %v33
  %v2037 = vperm.slane %v2036, 0
  %s2038 = scalar_lea.vmem %s5, 48
  %2039 = vst.msk [vmem:[%s2038] sm:$0xff] %vm334, %v2037
  %s2040 = scalar_lea.vmem %s0, 896
  %v2041 = vld [vmem:[%s2040] sm:$0xff]
  %v2042 = vld [vmem:[%s2040 + $0x8] sm:$0xff]
  %v2043 = vld [vmem:[%s2040 + $0x10] sm:$0xff]
  %v2044 = vld [vmem:[%s2040 + $0x18] sm:$0xff]
  %v2045 = vld [vmem:[%s2040 + $0x20] sm:$0xff]
  %v2046 = vld [vmem:[%s2040 + $0x28] sm:$0xff]
  %v2047 = vld [vmem:[%s2040 + $0x30] sm:$0xff]
  %v2048 = vld [vmem:[%s2040 + $0x38] sm:$0xff]
  %v2049 = vld [vmem:[%s2040 + $0x40] sm:$0x1]
  %v2050 = vld [vmem:[%s2040 + $0x48] sm:$0x1]
  %v2051 = vld [vmem:[%s2040 + $0x50] sm:$0x1]
  %v2052 = vld [vmem:[%s2040 + $0x58] sm:$0x1]
  %v2053 = vld [vmem:[%s2040 + $0x60] sm:$0x1]
  %v2054 = vld [vmem:[%s2040 + $0x68] sm:$0x1]
  %v2055 = vld [vmem:[%s2040 + $0x70] sm:$0x1]
  %v2056 = vld [vmem:[%s2040 + $0x78] sm:$0x1]
  %v2058 = vsel %vm57, %v2049, 0
  %v2061 = vsel %vm57, %v2050, 0
  %v2064 = vsel %vm57, %v2051, 0
  %v2067 = vsel %vm57, %v2052, 0
  %v2070 = vsel %vm57, %v2053, 0
  %v2073 = vsel %vm57, %v2054, 0
  %v2076 = vsel %vm57, %v2055, 0
  %v2079 = vsel %vm57, %v2056, 0
  %2081 = vmatpush.msra.mxu0 0.0
  %2082 = vmatpush.msra.mxu0 0.0
  %2083 = vmatpush.msra.mxu0 0.0
  %2084 = vmatpush.msra.mxu0 0.0
  %2085 = vmatpush.msra.mxu0 0.0
  %2086 = vmatpush.msra.mxu0 0.0
  %2087 = vmatpush.msra.mxu0 0.0
  %2088 = vmatpush.msra.mxu0 0.0
  %2089 = vmatpush.msra.mxu0 0.0
  %2090 = vmatpush.msra.mxu0 0.0
  %2091 = vmatpush.msra.mxu0 0.0
  %2092 = vmatpush.msra.mxu0 0.0
  %2093 = vmatpush.msra.mxu0 0.0
  %2094 = vmatpush.msra.mxu0 0.0
  %2095 = vmatpush.msra.mxu0 %v2058
  %2096 = vmatpush.msra.mxu0 %v2041
  %2097 = vmatmul.f32.gmra.mxu0 %v52
  %v2098 = vpop.f32.mrf.mxu0
  %v2099 = vadd.f32 0.0, %v2098
  %2100 = vmatmul.f32.gmra.mxu0 %v55
  %v2101 = vpop.f32.mrf.mxu0
  %v2102 = vadd.f32 0.0, %v2101
  %2103 = vdwg.mxu0
  %2104 = vmatpush.msra.mxu0 0.0
  %2105 = vmatpush.msra.mxu0 0.0
  %2106 = vmatpush.msra.mxu0 0.0
  %2107 = vmatpush.msra.mxu0 0.0
  %2108 = vmatpush.msra.mxu0 0.0
  %2109 = vmatpush.msra.mxu0 0.0
  %2110 = vmatpush.msra.mxu0 0.0
  %2111 = vmatpush.msra.mxu0 0.0
  %2112 = vmatpush.msra.mxu0 0.0
  %2113 = vmatpush.msra.mxu0 0.0
  %2114 = vmatpush.msra.mxu0 0.0
  %2115 = vmatpush.msra.mxu0 0.0
  %2116 = vmatpush.msra.mxu0 0.0
  %2117 = vmatpush.msra.mxu0 0.0
  %2118 = vmatpush.msra.mxu0 %v2061
  %2119 = vmatpush.msra.mxu0 %v2042
  %2120 = vmatmul.f32.gmra.mxu0 %v52
  %v2121 = vpop.f32.mrf.mxu0
  %v2122 = vadd.f32 0.0, %v2121
  %2123 = vmatmul.f32.gmra.mxu0 %v55
  %v2124 = vpop.f32.mrf.mxu0
  %v2125 = vadd.f32 0.0, %v2124
  %2126 = vdwg.mxu0
  %2127 = vmatpush.msra.mxu0 0.0
  %2128 = vmatpush.msra.mxu0 0.0
  %2129 = vmatpush.msra.mxu0 0.0
  %2130 = vmatpush.msra.mxu0 0.0
  %2131 = vmatpush.msra.mxu0 0.0
  %2132 = vmatpush.msra.mxu0 0.0
  %2133 = vmatpush.msra.mxu0 0.0
  %2134 = vmatpush.msra.mxu0 0.0
  %2135 = vmatpush.msra.mxu0 0.0
  %2136 = vmatpush.msra.mxu0 0.0
  %2137 = vmatpush.msra.mxu0 0.0
  %2138 = vmatpush.msra.mxu0 0.0
  %2139 = vmatpush.msra.mxu0 0.0
  %2140 = vmatpush.msra.mxu0 0.0
  %2141 = vmatpush.msra.mxu0 %v2064
  %2142 = vmatpush.msra.mxu0 %v2043
  %2143 = vmatmul.f32.gmra.mxu0 %v52
  %v2144 = vpop.f32.mrf.mxu0
  %v2145 = vadd.f32 0.0, %v2144
  %2146 = vmatmul.f32.gmra.mxu0 %v55
  %v2147 = vpop.f32.mrf.mxu0
  %v2148 = vadd.f32 0.0, %v2147
  %2149 = vdwg.mxu0
  %2150 = vmatpush.msra.mxu0 0.0
  %2151 = vmatpush.msra.mxu0 0.0
  %2152 = vmatpush.msra.mxu0 0.0
  %2153 = vmatpush.msra.mxu0 0.0
  %2154 = vmatpush.msra.mxu0 0.0
  %2155 = vmatpush.msra.mxu0 0.0
  %2156 = vmatpush.msra.mxu0 0.0
  %2157 = vmatpush.msra.mxu0 0.0
  %2158 = vmatpush.msra.mxu0 0.0
  %2159 = vmatpush.msra.mxu0 0.0
  %2160 = vmatpush.msra.mxu0 0.0
  %2161 = vmatpush.msra.mxu0 0.0
  %2162 = vmatpush.msra.mxu0 0.0
  %2163 = vmatpush.msra.mxu0 0.0
  %2164 = vmatpush.msra.mxu0 %v2067
  %2165 = vmatpush.msra.mxu0 %v2044
  %2166 = vmatmul.f32.gmra.mxu0 %v52
  %v2167 = vpop.f32.mrf.mxu0
  %v2168 = vadd.f32 0.0, %v2167
  %2169 = vmatmul.f32.gmra.mxu0 %v55
  %v2170 = vpop.f32.mrf.mxu0
  %v2171 = vadd.f32 0.0, %v2170
  %2172 = vdwg.mxu0
  %2173 = vmatpush.msra.mxu0 0.0
  %2174 = vmatpush.msra.mxu0 0.0
  %2175 = vmatpush.msra.mxu0 0.0
  %2176 = vmatpush.msra.mxu0 0.0
  %2177 = vmatpush.msra.mxu0 0.0
  %2178 = vmatpush.msra.mxu0 0.0
  %2179 = vmatpush.msra.mxu0 0.0
  %2180 = vmatpush.msra.mxu0 0.0
  %2181 = vmatpush.msra.mxu0 0.0
  %2182 = vmatpush.msra.mxu0 0.0
  %2183 = vmatpush.msra.mxu0 0.0
  %2184 = vmatpush.msra.mxu0 0.0
  %2185 = vmatpush.msra.mxu0 0.0
  %2186 = vmatpush.msra.mxu0 0.0
  %2187 = vmatpush.msra.mxu0 %v2070
  %2188 = vmatpush.msra.mxu0 %v2045
  %2189 = vmatmul.f32.gmra.mxu0 %v52
  %v2190 = vpop.f32.mrf.mxu0
  %v2191 = vadd.f32 0.0, %v2190
  %2192 = vmatmul.f32.gmra.mxu0 %v55
  %v2193 = vpop.f32.mrf.mxu0
  %v2194 = vadd.f32 0.0, %v2193
  %2195 = vdwg.mxu0
  %2196 = vmatpush.msra.mxu0 0.0
  %2197 = vmatpush.msra.mxu0 0.0
  %2198 = vmatpush.msra.mxu0 0.0
  %2199 = vmatpush.msra.mxu0 0.0
  %2200 = vmatpush.msra.mxu0 0.0
  %2201 = vmatpush.msra.mxu0 0.0
  %2202 = vmatpush.msra.mxu0 0.0
  %2203 = vmatpush.msra.mxu0 0.0
  %2204 = vmatpush.msra.mxu0 0.0
  %2205 = vmatpush.msra.mxu0 0.0
  %2206 = vmatpush.msra.mxu0 0.0
  %2207 = vmatpush.msra.mxu0 0.0
  %2208 = vmatpush.msra.mxu0 0.0
  %2209 = vmatpush.msra.mxu0 0.0
  %2210 = vmatpush.msra.mxu0 %v2073
  %2211 = vmatpush.msra.mxu0 %v2046
  %2212 = vmatmul.f32.gmra.mxu0 %v52
  %v2213 = vpop.f32.mrf.mxu0
  %v2214 = vadd.f32 0.0, %v2213
  %2215 = vmatmul.f32.gmra.mxu0 %v55
  %v2216 = vpop.f32.mrf.mxu0
  %v2217 = vadd.f32 0.0, %v2216
  %2218 = vdwg.mxu0
  %2219 = vmatpush.msra.mxu0 0.0
  %2220 = vmatpush.msra.mxu0 0.0
  %2221 = vmatpush.msra.mxu0 0.0
  %2222 = vmatpush.msra.mxu0 0.0
  %2223 = vmatpush.msra.mxu0 0.0
  %2224 = vmatpush.msra.mxu0 0.0
  %2225 = vmatpush.msra.mxu0 0.0
  %2226 = vmatpush.msra.mxu0 0.0
  %2227 = vmatpush.msra.mxu0 0.0
  %2228 = vmatpush.msra.mxu0 0.0
  %2229 = vmatpush.msra.mxu0 0.0
  %2230 = vmatpush.msra.mxu0 0.0
  %2231 = vmatpush.msra.mxu0 0.0
  %2232 = vmatpush.msra.mxu0 0.0
  %2233 = vmatpush.msra.mxu0 %v2076
  %2234 = vmatpush.msra.mxu0 %v2047
  %2235 = vmatmul.f32.gmra.mxu0 %v52
  %v2236 = vpop.f32.mrf.mxu0
  %v2237 = vadd.f32 0.0, %v2236
  %2238 = vmatmul.f32.gmra.mxu0 %v55
  %v2239 = vpop.f32.mrf.mxu0
  %v2240 = vadd.f32 0.0, %v2239
  %2241 = vdwg.mxu0
  %2242 = vmatpush.msra.mxu0 0.0
  %2243 = vmatpush.msra.mxu0 0.0
  %2244 = vmatpush.msra.mxu0 0.0
  %2245 = vmatpush.msra.mxu0 0.0
  %2246 = vmatpush.msra.mxu0 0.0
  %2247 = vmatpush.msra.mxu0 0.0
  %2248 = vmatpush.msra.mxu0 0.0
  %2249 = vmatpush.msra.mxu0 0.0
  %2250 = vmatpush.msra.mxu0 0.0
  %2251 = vmatpush.msra.mxu0 0.0
  %2252 = vmatpush.msra.mxu0 0.0
  %2253 = vmatpush.msra.mxu0 0.0
  %2254 = vmatpush.msra.mxu0 0.0
  %2255 = vmatpush.msra.mxu0 0.0
  %2256 = vmatpush.msra.mxu0 %v2079
  %2257 = vmatpush.msra.mxu0 %v2048
  %2258 = vmatmul.f32.gmra.mxu0 %v52
  %v2259 = vpop.f32.mrf.mxu0
  %v2260 = vadd.f32 0.0, %v2259
  %2261 = vmatmul.f32.gmra.mxu0 %v55
  %v2262 = vpop.f32.mrf.mxu0
  %v2263 = vadd.f32 0.0, %v2262
  %2264 = vdwg.mxu0
  %v2265 = vmax.f32 %v2099, %v2145
  %v2266 = vmax.f32 %v2122, %v2168
  %v2267 = vmax.f32 %v2102, %v2148
  %v2268 = vmax.f32 %v2125, %v2171
  %v2269 = vmax.f32 %v2191, %v2237
  %v2270 = vmax.f32 %v2214, %v2260
  %v2271 = vmax.f32 %v2194, %v2240
  %v2272 = vmax.f32 %v2217, %v2263
  %v2273 = vmax.f32 %v2265, %v2269
  %v2274 = vmax.f32 %v2266, %v2270
  %v2275 = vmax.f32 %v2267, %v2271
  %v2276 = vmax.f32 %v2268, %v2272
  %v2277 = vadd.f32 %v2273, %v281
  %v2278 = vadd.f32 %v2274, %v281
  %v2279 = vadd.f32 %v2275, %v286
  %v2280 = vadd.f32 %v2276, %v286
  %v2281 = vmax.f32 %v2277, 0.0
  %v2282 = vmax.f32 %v2278, 0.0
  %v2283 = vmax.f32 %v2279, 0.0
  %v2284 = vmax.f32 %v2280, 0.0
  %v2285 = vmul.f32 %v2281, %v24
  %v2286 = vmul.f32 %v2282, %v25
  %v2287 = vmul.f32 %v2283, %v26
  %v2288 = vmul.f32 %v2284, %v27
  %v2289 = vadd.f32 %v2285, %v2286
  %v2290 = vadd.f32 %v2289, %v2287
  %v2291 = vadd.f32 %v2290, %v2288
  %2292 = vadd.xlane.f32.xlu0 %v2291
  %v2293 = vpop.xlane.xlu0 %2292
  %v2294 = vrot.slane %v2293, 4
  %v2295 = vadd.f32 %v2293, %v2294
  %v2296 = vrot.slane %v2295, 2
  %v2297 = vadd.f32 %v2295, %v2296
  %v2298 = vrot.slane %v2297, 1
  %v2299 = vadd.f32 %v2297, %v2298
  %s2300 = vtos %v2299
  %v2301 = vstv %s2300
  %v2302 = vmul.f32 %v2281, %v29
  %v2303 = vmul.f32 %v2282, %v30
  %v2304 = vmul.f32 %v2283, %v31
  %v2305 = vmul.f32 %v2284, %v32
  %v2306 = vadd.f32 %v2302, %v2303
  %v2307 = vadd.f32 %v2306, %v2304
  %v2308 = vadd.f32 %v2307, %v2305
  %2309 = vadd.xlane.f32.xlu0 %v2308
  %v2310 = vpop.xlane.xlu0 %2309
  %v2311 = vrot.slane %v2310, 4
  %v2312 = vadd.f32 %v2310, %v2311
  %v2313 = vrot.slane %v2312, 2
  %v2314 = vadd.f32 %v2312, %v2313
  %v2315 = vrot.slane %v2314, 1
  %v2316 = vadd.f32 %v2314, %v2315
  %s2317 = vtos %v2316
  %v2318 = vstv %s2317
  %v2319 = vsel %vm330, %v2301, %v2318
  %v2320 = vadd.f32 %v2319, %v33
  %v2321 = vperm.slane %v2320, 0
  %s2322 = scalar_lea.vmem %s5, 56
  %2323 = vst.msk [vmem:[%s2322] sm:$0xff] %vm334, %v2321
  // Predicated region
  $region22: #{simple_cnn_forward.1} parent=0 // pred_check
    _
  $region23: #{simple_cnn_forward.1} parent=0 // pred_check_branch
    %2325 = sbr.rel (0) target = $region25
  $region24: #{simple_cnn_forward.1} parent=0 // pred_region
    _
  $region25: #{simple_cnn_forward.1} parent=0 // pred_fallthru
    _
  // Predicated region
  $region26: #{simple_cnn_forward.1} parent=0 // pred_check
    _
  $region27: #{simple_cnn_forward.1} parent=0 // pred_check_branch
    %2327 = sbr.rel (0) target = $region29
  $region28: #{simple_cnn_forward.1} parent=0 // pred_region
    _
  $region29: #{simple_cnn_forward.1} parent=0 // pred_fallthru
    _

</llo_original>
